<compile_context>
chip_gen: v5e
topology: v5e:2x2
jax: 0.10.0
libtpu: 0.0.40
codegen_flags: <defaults>
</compile_context>

<pallas_src>
import functools

import jax
import jax.numpy as jnp
from jax import lax
from jax.experimental import pallas as pl
from jax.experimental.pallas import tpu as pltpu


def _flow_step_kernel(
    x_ref, aff_w_ref, aff_b_ref, mask_ref, seg_ref,
    bn1_a_ref, bn1_b_ref, w1_ref,
    bn2_a_ref, bn2_b_ref, w_mid_ref,
    bn3_a_ref, bn3_b_ref, w_out_ref, b_out_ref,
    coup_scale_ref,
    out_x_ref, s_sum_ref,
    col2_ref,
    *, H, W, B, Cq,
):
    """One grid step = B images; activations are (channels, B*H*W)."""
    HW = H * W
    L = B * HW
    M = w_mid_ref.shape[0]

    def masked_taps(h):
        """Nine (dh, dw) taps of a 3x3 SAME conv, in (dh, dw) order.

        Each tap is a lane rotation of the concatenated B*HW axis; lanes where
        the rotation crosses a spatial or image boundary are exactly the lanes
        zeroed by the precomputed mask, so the result matches a per-image
        zero-padded conv.
        """
        k = 0
        for dh in (-1, 0, 1):
            for dw in (-1, 0, 1):
                off = dh * W + dw
                if off == 0:
                    tap = h                       # centre tap: no shift, no mask
                else:
                    tap = pltpu.roll(h, shift=(-off) % L, axis=1)
                    tap = tap * mask_ref[k:k + 1, :]
                yield k, tap
                k += 1

    x = x_ref[...]                                # (C, L) f32

    # ---- ActNorm + InvConv folded into one per-pixel affine: z = A x + c ----
    z = jnp.dot(aff_w_ref[...], x, preferred_element_type=jnp.float32)
    z = z + aff_b_ref[...]
    x_change = z[:Cq]                             # (Cq, L)
    x_id = z[Cq:]                                 # (Cq, L)

    # ---- Coupling NN: bn-relu-conv3x3 -> bn-relu-conv1x1 -> bn-relu-conv3x3 -
    # (1) im2col patches (9*Cq rows) kept in registers, bf16 operands.
    h = jnp.maximum(x_id * bn1_a_ref[...] + bn1_b_ref[...], 0.0)
    patches1 = jnp.concatenate([tap for _, tap in masked_taps(h)], axis=0)
    h = jnp.dot(w1_ref[...], patches1.astype(jnp.bfloat16),
                preferred_element_type=jnp.float32)            # (M, L)

    # (2) 1x1 conv as a plain matmul.
    h = jnp.maximum(h * bn2_a_ref[...] + bn2_b_ref[...], 0.0)
    h = jnp.dot(w_mid_ref[...], h.astype(jnp.bfloat16),
                preferred_element_type=jnp.float32)            # (M, L)

    # (3) fused s/t output conv through a bf16 im2col scratch (per-tap cast).
    h = jnp.maximum(h * bn3_a_ref[...] + bn3_b_ref[...], 0.0)
    for k, tap in masked_taps(h):
        col2_ref[k * M:(k + 1) * M, :] = tap.astype(jnp.bfloat16)
    st = jnp.dot(w_out_ref[...], col2_ref[...],
                 preferred_element_type=jnp.float32)           # (2*Cq, L)
    st = st + b_out_ref[...]
    s = coup_scale_ref[...] * jnp.tanh(st[:Cq])
    t = st[Cq:]
    x_change = (x_change + t) * jnp.exp(s)

    # One lane-dense store of the whole (C, L) output block.
    out_x_ref[...] = jnp.concatenate([x_change, x_id], axis=0)

    # Per-image sum of s reduced in-kernel (sublane reduce + lane-segment
    # matmul) so only B scalars go back to HBM instead of a (Cq, HW) slab
    # per image.
    s_red = jnp.sum(s, axis=0, keepdims=True)                  # (1, L)
    s_sum_ref[0] = jnp.dot(s_red, seg_ref[...],
                           preferred_element_type=jnp.float32)  # (1, B)


def _pick_images_per_step(n):
    """Largest B <= 8 dividing n while keeping >= 2 grid steps (v7x megacore)."""
    best = 1
    for cand in range(2, min(n, 8) + 1):
        if n % cand == 0 and n // cand >= 2:
            best = cand
    return best


def flow_step_forward(x_nchw, sldj, params, *, images_per_step=None):
    """Forward (reverse=False) pass of _FlowStep.  x_nchw: (N, C, H, W)."""
    N, C, H, W = x_nchw.shape
    Cq = C // 2
    M = params["w_mid"].shape[0]
    HW = H * W
    B = images_per_step if images_per_step is not None else _pick_images_per_step(N)
    assert N % B == 0
    NB = N // B
    L = B * HW

    # (N, C, H, W) -> (C, N*HW): channels on sublanes, images concatenated on
    # the lane axis (one tiny XLA transpose; the kernel then sees B*HW-lane
    # RHS tiles with shared weights).
    x_cl = jnp.transpose(x_nchw.reshape(N, C, HW).astype(jnp.float32),
                         (1, 0, 2)).reshape(C, N * HW)

    # TODO(synk): the weight preprocessing below (folds, transposes, slogdet)
    # runs every call; cache it outside when params are static across calls.

    # ActNorm folded into the invertible 1x1 conv: z = A x + c.
    scale = jnp.exp(params["an_logs"].reshape(C))
    aff_w = (params["w_inv"] * scale[None, :]).astype(jnp.float32)       # (C, C)
    aff_b = (aff_w @ params["an_bias"].reshape(C, 1)).astype(jnp.float32)

    # Constant part of the log-det (torch.slogdet has no in-kernel equivalent).
    base_ldj = (jnp.sum(params["an_logs"])
                + jnp.linalg.slogdet(params["w_inv"])[1]) * float(HW)

    # 3x3 conv weights -> (cout, 9*cin) matrices matching the kernel's tap
    # order ((dh, dw) taps, input channels fastest).
    w1 = jnp.transpose(params["w_in"], (3, 0, 1, 2)).reshape(M, 9 * Cq)
    w1 = w1.astype(jnp.bfloat16)
    w_mid = params["w_mid"].astype(jnp.bfloat16)                         # (out, in)
    # Fuse the interleaved even (s) / odd (t) output channels into one conv.
    w_out = jnp.concatenate([params["w_out"][..., 0::2],
                             params["w_out"][..., 1::2]], axis=-1)
    w_out = jnp.transpose(w_out, (3, 0, 1, 2)).reshape(2 * Cq, 9 * M)
    w_out = w_out.astype(jnp.bfloat16)
    b_out = jnp.concatenate([params["b_out"][0::2],
                             params["b_out"][1::2]]).reshape(2 * Cq, 1)
    b_out = b_out.astype(jnp.float32)

    # Combined row/col validity mask per (dh, dw) tap, tiled across the B
    # images sharing a grid step's lane axis.
    row = jnp.arange(HW, dtype=jnp.int32) // W
    col = jnp.arange(HW, dtype=jnp.int32) % W
    masks = []
    for dh in (-1, 0, 1):
        for dw in (-1, 0, 1):
            ok = ((row + dh >= 0) & (row + dh <= H - 1)
                  & (col + dw >= 0) & (col + dw <= W - 1))
            masks.append(ok.astype(jnp.float32))
    tap_mask = jnp.tile(jnp.stack(masks, axis=0), (1, B))                # (9, L)

    # Lane-segment -> image selector for the in-kernel per-image sum of s.
    seg = jnp.kron(jnp.eye(B, dtype=jnp.float32),
                   jnp.ones((HW, 1), jnp.float32))                       # (L, B)

    bn1_a = params["bn1_a"].reshape(Cq, 1)
    bn1_b = params["bn1_b"].reshape(Cq, 1)
    bn2_a = params["bn2_a"].reshape(M, 1)
    bn2_b = params["bn2_b"].reshape(M, 1)
    bn3_a = params["bn3_a"].reshape(M, 1)
    bn3_b = params["bn3_b"].reshape(M, 1)
    coup_scale = params["coup_scale"].reshape(Cq, 1)

    vmem = pl.BlockSpec(memory_space=pltpu.MemorySpace.VMEM)

    flops = 2 * N * HW * (C * C + M * 9 * Cq + M * M + 2 * Cq * 9 * M)
    bytes_accessed = (2 * N * C * HW * 4 + N * 4 + 9 * L * 4 + L * B * 4
                      + (M * 9 * Cq + M * M + 2 * Cq * 9 * M) * 2)
    cost = pl.CostEstimate(flops=flops, transcendentals=2 * Cq * N * HW,
                           bytes_accessed=bytes_accessed)

    # NOTE: VMEM demand at B<=8 is well under the 32 MiB scoped default on all
    # generations (col2 bf16 is the dominant scratch); raise vmem_limit_bytes
    # in CompilerParams before pushing B higher, especially on v7x (64 MiB).
    out_x, s_sum = pl.pallas_call(
        functools.partial(_flow_step_kernel, H=H, W=W, B=B, Cq=Cq),
        grid=(NB,),
        out_shape=(
            jax.ShapeDtypeStruct((C, N * HW), jnp.float32),
            jax.ShapeDtypeStruct((NB, 1, B), jnp.float32),
        ),
        in_specs=[pl.BlockSpec((C, L), lambda i: (0, i))] + [vmem] * 15,
        out_specs=(
            pl.BlockSpec((C, L), lambda i: (0, i)),
            pl.BlockSpec((1, 1, B), lambda i: (i, 0, 0)),
        ),
        scratch_shapes=[
            pltpu.VMEM((9 * M, L), jnp.bfloat16),   # bf16 im2col for fused s/t conv
        ],
        compiler_params=pltpu.CompilerParams(
            dimension_semantics=("parallel",)),
        cost_estimate=cost,
    )(
        x_cl, aff_w, aff_b, tap_mask, seg,
        bn1_a, bn1_b, w1,
        bn2_a, bn2_b, w_mid,
        bn3_a, bn3_b, w_out, b_out,
        coup_scale,
    )

    out_x = jnp.transpose(out_x.reshape(C, N, HW), (1, 0, 2)).reshape(N, C, H, W)
    out_sldj = sldj.astype(jnp.float32) + base_ldj + s_sum.reshape(N)
    return out_x, out_sldj


def init_params(key, in_channels, mid_channels):
    """Deterministic synthetic parameters matching the module's shapes."""
    C, M = in_channels, mid_channels
    Cq = C // 2
    ks = jax.random.split(key, 7)
    eps = 1e-5
    bn_a = lambda ch: jnp.full((1, ch), 1.0 / jnp.sqrt(1.0 + eps), jnp.float32)
    bn_b = lambda ch: jnp.zeros((1, ch), jnp.float32)
    return dict(
        # ActNorm (values as if already data-initialized).
        an_bias=0.1 * jax.random.normal(ks[0], (1, C), jnp.float32),
        an_logs=0.1 * jax.random.normal(ks[1], (1, C), jnp.float32),
        # InvConv: random orthogonal init (QR), as in the PyTorch module.
        w_inv=jnp.linalg.qr(jax.random.normal(ks[2], (C, C), jnp.float32))[0],
        # Coupling NN; BatchNorm2d folded to eval-mode scale/shift (default stats).
        bn1_a=bn_a(Cq), bn1_b=bn_b(Cq),
        w_in=0.05 * jax.random.normal(ks[3], (3, 3, Cq, M), jnp.float32),   # HWIO
        bn2_a=bn_a(M), bn2_b=bn_b(M),
        w_mid=0.05 * jax.random.normal(ks[4], (M, M), jnp.float32),         # (out, in)
        bn3_a=bn_a(M), bn3_b=bn_b(M),
        # torch zero-inits out_conv; small random values keep the test non-degenerate.
        w_out=0.05 * jax.random.normal(ks[5], (3, 3, M, 2 * Cq), jnp.float32),
        b_out=0.05 * jax.random.normal(ks[6], (2 * Cq,), jnp.float32),
        coup_scale=jnp.ones((1, Cq), jnp.float32),
    )


def ref_forward(x_nchw, sldj, p):
    """Pure-JAX reference mirroring the PyTorch forward (reverse=False)."""
    N, C, H, W = x_nchw.shape
    Cq = C // 2
    hp = lax.Precision.HIGHEST
    dn = ("NHWC", "HWIO", "NHWC")
    x = jnp.transpose(x_nchw, (0, 2, 3, 1))
    # ActNorm
    x = (x + p["an_bias"]) * jnp.exp(p["an_logs"])
    sldj = sldj + jnp.sum(p["an_logs"]) * (H * W)
    # InvConv
    sldj = sldj + jnp.linalg.slogdet(p["w_inv"])[1] * (H * W)
    x = jnp.einsum("nhwi,oi->nhwo", x, p["w_inv"], precision=hp)
    # Coupling
    xc, xi = x[..., :Cq], x[..., Cq:]
    h = jax.nn.relu(xi * p["bn1_a"] + p["bn1_b"])
    h = lax.conv_general_dilated(h, p["w_in"], (1, 1), "SAME",
                                 dimension_numbers=dn, precision=hp)
    h = jax.nn.relu(h * p["bn2_a"] + p["bn2_b"])
    h = jnp.einsum("nhwi,oi->nhwo", h, p["w_mid"], precision=hp)
    h = jax.nn.relu(h * p["bn3_a"] + p["bn3_b"])
    st = lax.conv_general_dilated(h, p["w_out"], (1, 1), "SAME",
                                  dimension_numbers=dn, precision=hp) + p["b_out"]
    s, t = st[..., 0::2], st[..., 1::2]
    s = p["coup_scale"] * jnp.tanh(s)
    xc = (xc + t) * jnp.exp(s)
    sldj = sldj + jnp.sum(s, axis=(1, 2, 3))
    x = jnp.concatenate([xc, xi], axis=-1)
    return jnp.transpose(x, (0, 3, 1, 2)), sldj


if __name__ == "__main__":
    N, C, H, W = 2, 4, 16, 16      # in_channels=4
    M = 32                         # mid_channels=32
    key = jax.random.PRNGKey(0)
    kx, kp = jax.random.split(key)
    x = jax.random.normal(kx, (N, C, H, W), jnp.float32)
    sldj = jnp.zeros((N,), jnp.float32)
    params = init_params(kp, C, M)

    fwd = jax.jit(flow_step_forward)
    out_x, out_sldj = fwd(x, sldj, params)
    jax.block_until_ready((out_x, out_sldj))

    assert out_x.shape == (N, C, H, W) and out_x.dtype == jnp.float32
    assert out_sldj.shape == (N,)

    ref_x, ref_sldj = ref_forward(x, sldj, params)
    assert jnp.allclose(out_x, ref_x, atol=5e-2, rtol=5e-2), \
        float(jnp.max(jnp.abs(out_x - ref_x)))
    assert jnp.allclose(out_sldj, ref_sldj, atol=5e-2, rtol=5e-2), \
        float(jnp.max(jnp.abs(out_sldj - ref_sldj)))
    print("KERNEL_OK")
</pallas_src>

<mosaic_0001>
module attributes {stable_mosaic.version = 11 : i64} {
  func.func @_flow_step_kernel(%arg0: i32, %arg1: memref<4x256xf32, #tpu.memory_space<vmem>>, %arg2: memref<4x4xf32, #tpu.memory_space<vmem>>, %arg3: memref<4x1xf32, #tpu.memory_space<vmem>>, %arg4: memref<9x256xf32, #tpu.memory_space<vmem>>, %arg5: memref<256x1xf32, #tpu.memory_space<vmem>>, %arg6: memref<2x1xf32, #tpu.memory_space<vmem>>, %arg7: memref<2x1xf32, #tpu.memory_space<vmem>>, %arg8: memref<32x18xbf16, #tpu.memory_space<vmem>>, %arg9: memref<32x1xf32, #tpu.memory_space<vmem>>, %arg10: memref<32x1xf32, #tpu.memory_space<vmem>>, %arg11: memref<32x32xbf16, #tpu.memory_space<vmem>>, %arg12: memref<32x1xf32, #tpu.memory_space<vmem>>, %arg13: memref<32x1xf32, #tpu.memory_space<vmem>>, %arg14: memref<4x288xbf16, #tpu.memory_space<vmem>>, %arg15: memref<4x1xf32, #tpu.memory_space<vmem>>, %arg16: memref<2x1xf32, #tpu.memory_space<vmem>>, %arg17: memref<4x256xf32, #tpu.memory_space<vmem>>, %arg18: memref<1x1x1xf32, #tpu.memory_space<vmem>>, %arg19: memref<288x256xbf16, #tpu.memory_space<vmem>>) attributes {dimension_semantics = [#tpu.dimension_semantics<parallel>], iteration_bounds = array<i64: 2>, scalar_prefetch = 0 : i64, scratch_operands = 1 : i64, tpu.core_type = #tpu.core_type<tc>, window_params = [{transform_indices = @transform_0, window_bounds = array<i64: 4, 256>}, {pipeline_mode = #tpu.pipeline_mode<synchronous>, transform_indices = @transform_1, window_bounds = array<i64: 4, 4>}, {pipeline_mode = #tpu.pipeline_mode<synchronous>, transform_indices = @transform_2, window_bounds = array<i64: 4, 1>}, {pipeline_mode = #tpu.pipeline_mode<synchronous>, transform_indices = @transform_3, window_bounds = array<i64: 9, 256>}, {pipeline_mode = #tpu.pipeline_mode<synchronous>, transform_indices = @transform_4, window_bounds = array<i64: 256, 1>}, {pipeline_mode = #tpu.pipeline_mode<synchronous>, transform_indices = @transform_5, window_bounds = array<i64: 2, 1>}, {pipeline_mode = #tpu.pipeline_mode<synchronous>, transform_indices = @transform_6, window_bounds = array<i64: 2, 1>}, {pipeline_mode = #tpu.pipeline_mode<synchronous>, transform_indices = @transform_7, window_bounds = array<i64: 32, 18>}, {pipeline_mode = #tpu.pipeline_mode<synchronous>, transform_indices = @transform_8, window_bounds = array<i64: 32, 1>}, {pipeline_mode = #tpu.pipeline_mode<synchronous>, transform_indices = @transform_9, window_bounds = array<i64: 32, 1>}, {pipeline_mode = #tpu.pipeline_mode<synchronous>, transform_indices = @transform_10, window_bounds = array<i64: 32, 32>}, {pipeline_mode = #tpu.pipeline_mode<synchronous>, transform_indices = @transform_11, window_bounds = array<i64: 32, 1>}, {pipeline_mode = #tpu.pipeline_mode<synchronous>, transform_indices = @transform_12, window_bounds = array<i64: 32, 1>}, {pipeline_mode = #tpu.pipeline_mode<synchronous>, transform_indices = @transform_13, window_bounds = array<i64: 4, 288>}, {pipeline_mode = #tpu.pipeline_mode<synchronous>, transform_indices = @transform_14, window_bounds = array<i64: 4, 1>}, {pipeline_mode = #tpu.pipeline_mode<synchronous>, transform_indices = @transform_15, window_bounds = array<i64: 2, 1>}, {transform_indices = @transform_16, window_bounds = array<i64: 4, 256>}, {transform_indices = @transform_17, window_bounds = array<i64: 1, 1, 1>}]} {
    %c0 = arith.constant 0 : index
    %c0_0 = arith.constant 0 : index
    %0 = vector.load %arg1[%c0, %c0_0] : memref<4x256xf32, #tpu.memory_space<vmem>>, vector<4x256xf32>
    %c0_1 = arith.constant 0 : index
    %c0_2 = arith.constant 0 : index
    %1 = vector.load %arg2[%c0_1, %c0_2] : memref<4x4xf32, #tpu.memory_space<vmem>>, vector<4x4xf32>
    %cst = arith.constant dense<0.000000e+00> : vector<4x256xf32>
    %2 = tpu.matmul %1, %0, %cst {dimension_numbers = #tpu.dot_dimension_numbers<[1], [0], [0], [1], [0, 0, 1, 1], [], []>} : vector<4x4xf32>, vector<4x256xf32>, vector<4x256xf32> -> vector<4x256xf32>
    %c0_3 = arith.constant 0 : index
    %c0_4 = arith.constant 0 : index
    %3 = vector.load %arg3[%c0_3, %c0_4] : memref<4x1xf32, #tpu.memory_space<vmem>>, vector<4x1xf32>
    %4 = vector.broadcast %3 : vector<4x1xf32> to vector<4x256xf32>
    %5 = arith.addf %2, %4 : vector<4x256xf32>
    %6 = vector.extract_strided_slice %5 {offsets = [0, 0], sizes = [2, 256], strides = [1, 1]} : vector<4x256xf32> to vector<2x256xf32>
    %7 = vector.extract_strided_slice %5 {offsets = [2, 0], sizes = [2, 256], strides = [1, 1]} : vector<4x256xf32> to vector<2x256xf32>
    %c0_5 = arith.constant 0 : index
    %c0_6 = arith.constant 0 : index
    %8 = vector.load %arg6[%c0_5, %c0_6] : memref<2x1xf32, #tpu.memory_space<vmem>>, vector<2x1xf32>
    %9 = vector.broadcast %8 : vector<2x1xf32> to vector<2x256xf32>
    %10 = arith.mulf %7, %9 : vector<2x256xf32>
    %c0_7 = arith.constant 0 : index
    %c0_8 = arith.constant 0 : index
    %11 = vector.load %arg7[%c0_7, %c0_8] : memref<2x1xf32, #tpu.memory_space<vmem>>, vector<2x1xf32>
    %12 = vector.broadcast %11 : vector<2x1xf32> to vector<2x256xf32>
    %13 = arith.addf %10, %12 : vector<2x256xf32>
    %cst_9 = arith.constant 0.000000e+00 : f32
    %14 = vector.broadcast %cst_9 : f32 to vector<2x256xf32>
    %15 = arith.maximumf %13, %14 : vector<2x256xf32>
    %c17_i32 = arith.constant 17 : i32
    %16 = tpu.dynamic_rotate %15 by %c17_i32 dim 1 : vector<2x256xf32>, i32 -> vector<2x256xf32>
    %c0_10 = arith.constant 0 : index
    %c0_11 = arith.constant 0 : index
    %17 = vector.load %arg4[%c0_10, %c0_11] : memref<9x256xf32, #tpu.memory_space<vmem>>, vector<1x256xf32>
    %18 = vector.broadcast %17 : vector<1x256xf32> to vector<2x256xf32>
    %19 = arith.mulf %16, %18 : vector<2x256xf32>
    %c16_i32 = arith.constant 16 : i32
    %20 = tpu.dynamic_rotate %15 by %c16_i32 dim 1 : vector<2x256xf32>, i32 -> vector<2x256xf32>
    %c1 = arith.constant 1 : index
    %c0_12 = arith.constant 0 : index
    %21 = vector.load %arg4[%c1, %c0_12] : memref<9x256xf32, #tpu.memory_space<vmem>>, vector<1x256xf32>
    %22 = vector.broadcast %21 : vector<1x256xf32> to vector<2x256xf32>
    %23 = arith.mulf %20, %22 : vector<2x256xf32>
    %c15_i32 = arith.constant 15 : i32
    %24 = tpu.dynamic_rotate %15 by %c15_i32 dim 1 : vector<2x256xf32>, i32 -> vector<2x256xf32>
    %c2 = arith.constant 2 : index
    %c0_13 = arith.constant 0 : index
    %25 = vector.load %arg4[%c2, %c0_13] : memref<9x256xf32, #tpu.memory_space<vmem>>, vector<1x256xf32>
    %26 = vector.broadcast %25 : vector<1x256xf32> to vector<2x256xf32>
    %27 = arith.mulf %24, %26 : vector<2x256xf32>
    %c1_i32 = arith.constant 1 : i32
    %28 = tpu.dynamic_rotate %15 by %c1_i32 dim 1 : vector<2x256xf32>, i32 -> vector<2x256xf32>
    %c3 = arith.constant 3 : index
    %c0_14 = arith.constant 0 : index
    %29 = vector.load %arg4[%c3, %c0_14] : memref<9x256xf32, #tpu.memory_space<vmem>>, vector<1x256xf32>
    %30 = vector.broadcast %29 : vector<1x256xf32> to vector<2x256xf32>
    %31 = arith.mulf %28, %30 : vector<2x256xf32>
    %c255_i32 = arith.constant 255 : i32
    %32 = tpu.dynamic_rotate %15 by %c255_i32 dim 1 : vector<2x256xf32>, i32 -> vector<2x256xf32>
    %c5 = arith.constant 5 : index
    %c0_15 = arith.constant 0 : index
    %33 = vector.load %arg4[%c5, %c0_15] : memref<9x256xf32, #tpu.memory_space<vmem>>, vector<1x256xf32>
    %34 = vector.broadcast %33 : vector<1x256xf32> to vector<2x256xf32>
    %35 = arith.mulf %32, %34 : vector<2x256xf32>
    %c241_i32 = arith.constant 241 : i32
    %36 = tpu.dynamic_rotate %15 by %c241_i32 dim 1 : vector<2x256xf32>, i32 -> vector<2x256xf32>
    %c6 = arith.constant 6 : index
    %c0_16 = arith.constant 0 : index
    %37 = vector.load %arg4[%c6, %c0_16] : memref<9x256xf32, #tpu.memory_space<vmem>>, vector<1x256xf32>
    %38 = vector.broadcast %37 : vector<1x256xf32> to vector<2x256xf32>
    %39 = arith.mulf %36, %38 : vector<2x256xf32>
    %c240_i32 = arith.constant 240 : i32
    %40 = tpu.dynamic_rotate %15 by %c240_i32 dim 1 : vector<2x256xf32>, i32 -> vector<2x256xf32>
    %c7 = arith.constant 7 : index
    %c0_17 = arith.constant 0 : index
    %41 = vector.load %arg4[%c7, %c0_17] : memref<9x256xf32, #tpu.memory_space<vmem>>, vector<1x256xf32>
    %42 = vector.broadcast %41 : vector<1x256xf32> to vector<2x256xf32>
    %43 = arith.mulf %40, %42 : vector<2x256xf32>
    %c239_i32 = arith.constant 239 : i32
    %44 = tpu.dynamic_rotate %15 by %c239_i32 dim 1 : vector<2x256xf32>, i32 -> vector<2x256xf32>
    %c8 = arith.constant 8 : index
    %c0_18 = arith.constant 0 : index
    %45 = vector.load %arg4[%c8, %c0_18] : memref<9x256xf32, #tpu.memory_space<vmem>>, vector<1x256xf32>
    %46 = vector.broadcast %45 : vector<1x256xf32> to vector<2x256xf32>
    %47 = arith.mulf %44, %46 : vector<2x256xf32>
    %48 = tpu.concatenate %19, %23, %27, %31, %15, %35, %39, %43, %47 in 0 : vector<2x256xf32>, vector<2x256xf32>, vector<2x256xf32>, vector<2x256xf32>, vector<2x256xf32>, vector<2x256xf32>, vector<2x256xf32>, vector<2x256xf32>, vector<2x256xf32> -> vector<18x256xf32>
    %c0_19 = arith.constant 0 : index
    %c0_20 = arith.constant 0 : index
    %49 = vector.load %arg8[%c0_19, %c0_20] : memref<32x18xbf16, #tpu.memory_space<vmem>>, vector<32x18xbf16>
    %50 = arith.truncf %48 : vector<18x256xf32> to vector<18x256xbf16>
    %cst_21 = arith.constant dense<0.000000e+00> : vector<32x256xf32>
    %51 = tpu.matmul %49, %50, %cst_21 {dimension_numbers = #tpu.dot_dimension_numbers<[1], [0], [0], [1], [0, 0, 1, 1], [], []>} : vector<32x18xbf16>, vector<18x256xbf16>, vector<32x256xf32> -> vector<32x256xf32>
    %c0_22 = arith.constant 0 : index
    %c0_23 = arith.constant 0 : index
    %52 = vector.load %arg9[%c0_22, %c0_23] : memref<32x1xf32, #tpu.memory_space<vmem>>, vector<32x1xf32>
    %53 = vector.broadcast %52 : vector<32x1xf32> to vector<32x256xf32>
    %54 = arith.mulf %51, %53 : vector<32x256xf32>
    %c0_24 = arith.constant 0 : index
    %c0_25 = arith.constant 0 : index
    %55 = vector.load %arg10[%c0_24, %c0_25] : memref<32x1xf32, #tpu.memory_space<vmem>>, vector<32x1xf32>
    %56 = vector.broadcast %55 : vector<32x1xf32> to vector<32x256xf32>
    %57 = arith.addf %54, %56 : vector<32x256xf32>
    %cst_26 = arith.constant 0.000000e+00 : f32
    %58 = vector.broadcast %cst_26 : f32 to vector<32x256xf32>
    %59 = arith.maximumf %57, %58 : vector<32x256xf32>
    %c0_27 = arith.constant 0 : index
    %c0_28 = arith.constant 0 : index
    %60 = vector.load %arg11[%c0_27, %c0_28] : memref<32x32xbf16, #tpu.memory_space<vmem>>, vector<32x32xbf16>
    %61 = arith.truncf %59 : vector<32x256xf32> to vector<32x256xbf16>
    %cst_29 = arith.constant dense<0.000000e+00> : vector<32x256xf32>
    %62 = tpu.matmul %60, %61, %cst_29 {dimension_numbers = #tpu.dot_dimension_numbers<[1], [0], [0], [1], [0, 0, 1, 1], [], []>} : vector<32x32xbf16>, vector<32x256xbf16>, vector<32x256xf32> -> vector<32x256xf32>
    %c0_30 = arith.constant 0 : index
    %c0_31 = arith.constant 0 : index
    %63 = vector.load %arg12[%c0_30, %c0_31] : memref<32x1xf32, #tpu.memory_space<vmem>>, vector<32x1xf32>
    %64 = vector.broadcast %63 : vector<32x1xf32> to vector<32x256xf32>
    %65 = arith.mulf %62, %64 : vector<32x256xf32>
    %c0_32 = arith.constant 0 : index
    %c0_33 = arith.constant 0 : index
    %66 = vector.load %arg13[%c0_32, %c0_33] : memref<32x1xf32, #tpu.memory_space<vmem>>, vector<32x1xf32>
    %67 = vector.broadcast %66 : vector<32x1xf32> to vector<32x256xf32>
    %68 = arith.addf %65, %67 : vector<32x256xf32>
    %cst_34 = arith.constant 0.000000e+00 : f32
    %69 = vector.broadcast %cst_34 : f32 to vector<32x256xf32>
    %70 = arith.maximumf %68, %69 : vector<32x256xf32>
    %c17_i32_35 = arith.constant 17 : i32
    %71 = tpu.dynamic_rotate %70 by %c17_i32_35 dim 1 : vector<32x256xf32>, i32 -> vector<32x256xf32>
    %c0_36 = arith.constant 0 : index
    %c0_37 = arith.constant 0 : index
    %72 = vector.load %arg4[%c0_36, %c0_37] : memref<9x256xf32, #tpu.memory_space<vmem>>, vector<1x256xf32>
    %73 = vector.broadcast %72 : vector<1x256xf32> to vector<32x256xf32>
    %74 = arith.mulf %71, %73 : vector<32x256xf32>
    %75 = arith.truncf %74 : vector<32x256xf32> to vector<32x256xbf16>
    %c0_38 = arith.constant 0 : index
    %c0_39 = arith.constant 0 : index
    %76 = vector.load %arg19[%c0_38, %c0_39] : memref<288x256xbf16, #tpu.memory_space<vmem>>, vector<32x256xbf16>
    tpu.vector_store %arg19[%c0_38, %c0_39], %75 {strides = array<i32>} : memref<288x256xbf16, #tpu.memory_space<vmem>>, vector<32x256xbf16>,
    %c16_i32_40 = arith.constant 16 : i32
    %77 = tpu.dynamic_rotate %70 by %c16_i32_40 dim 1 : vector<32x256xf32>, i32 -> vector<32x256xf32>
    %c1_41 = arith.constant 1 : index
    %c0_42 = arith.constant 0 : index
    %78 = vector.load %arg4[%c1_41, %c0_42] : memref<9x256xf32, #tpu.memory_space<vmem>>, vector<1x256xf32>
    %79 = vector.broadcast %78 : vector<1x256xf32> to vector<32x256xf32>
    %80 = arith.mulf %77, %79 : vector<32x256xf32>
    %81 = arith.truncf %80 : vector<32x256xf32> to vector<32x256xbf16>
    %c32 = arith.constant 32 : index
    %c0_43 = arith.constant 0 : index
    %82 = vector.load %arg19[%c32, %c0_43] : memref<288x256xbf16, #tpu.memory_space<vmem>>, vector<32x256xbf16>
    tpu.vector_store %arg19[%c32, %c0_43], %81 {strides = array<i32>} : memref<288x256xbf16, #tpu.memory_space<vmem>>, vector<32x256xbf16>,
    %c15_i32_44 = arith.constant 15 : i32
    %83 = tpu.dynamic_rotate %70 by %c15_i32_44 dim 1 : vector<32x256xf32>, i32 -> vector<32x256xf32>
    %c2_45 = arith.constant 2 : index
    %c0_46 = arith.constant 0 : index
    %84 = vector.load %arg4[%c2_45, %c0_46] : memref<9x256xf32, #tpu.memory_space<vmem>>, vector<1x256xf32>
    %85 = vector.broadcast %84 : vector<1x256xf32> to vector<32x256xf32>
    %86 = arith.mulf %83, %85 : vector<32x256xf32>
    %87 = arith.truncf %86 : vector<32x256xf32> to vector<32x256xbf16>
    %c64 = arith.constant 64 : index
    %c0_47 = arith.constant 0 : index
    %88 = vector.load %arg19[%c64, %c0_47] : memref<288x256xbf16, #tpu.memory_space<vmem>>, vector<32x256xbf16>
    tpu.vector_store %arg19[%c64, %c0_47], %87 {strides = array<i32>} : memref<288x256xbf16, #tpu.memory_space<vmem>>, vector<32x256xbf16>,
    %c1_i32_48 = arith.constant 1 : i32
    %89 = tpu.dynamic_rotate %70 by %c1_i32_48 dim 1 : vector<32x256xf32>, i32 -> vector<32x256xf32>
    %c3_49 = arith.constant 3 : index
    %c0_50 = arith.constant 0 : index
    %90 = vector.load %arg4[%c3_49, %c0_50] : memref<9x256xf32, #tpu.memory_space<vmem>>, vector<1x256xf32>
    %91 = vector.broadcast %90 : vector<1x256xf32> to vector<32x256xf32>
    %92 = arith.mulf %89, %91 : vector<32x256xf32>
    %93 = arith.truncf %92 : vector<32x256xf32> to vector<32x256xbf16>
    %c96 = arith.constant 96 : index
    %c0_51 = arith.constant 0 : index
    %94 = vector.load %arg19[%c96, %c0_51] : memref<288x256xbf16, #tpu.memory_space<vmem>>, vector<32x256xbf16>
    tpu.vector_store %arg19[%c96, %c0_51], %93 {strides = array<i32>} : memref<288x256xbf16, #tpu.memory_space<vmem>>, vector<32x256xbf16>,
    %95 = arith.truncf %70 : vector<32x256xf32> to vector<32x256xbf16>
    %c128 = arith.constant 128 : index
    %c0_52 = arith.constant 0 : index
    %96 = vector.load %arg19[%c128, %c0_52] : memref<288x256xbf16, #tpu.memory_space<vmem>>, vector<32x256xbf16>
    tpu.vector_store %arg19[%c128, %c0_52], %95 {strides = array<i32>} : memref<288x256xbf16, #tpu.memory_space<vmem>>, vector<32x256xbf16>,
    %c255_i32_53 = arith.constant 255 : i32
    %97 = tpu.dynamic_rotate %70 by %c255_i32_53 dim 1 : vector<32x256xf32>, i32 -> vector<32x256xf32>
    %c5_54 = arith.constant 5 : index
    %c0_55 = arith.constant 0 : index
    %98 = vector.load %arg4[%c5_54, %c0_55] : memref<9x256xf32, #tpu.memory_space<vmem>>, vector<1x256xf32>
    %99 = vector.broadcast %98 : vector<1x256xf32> to vector<32x256xf32>
    %100 = arith.mulf %97, %99 : vector<32x256xf32>
    %101 = arith.truncf %100 : vector<32x256xf32> to vector<32x256xbf16>
    %c160 = arith.constant 160 : index
    %c0_56 = arith.constant 0 : index
    %102 = vector.load %arg19[%c160, %c0_56] : memref<288x256xbf16, #tpu.memory_space<vmem>>, vector<32x256xbf16>
    tpu.vector_store %arg19[%c160, %c0_56], %101 {strides = array<i32>} : memref<288x256xbf16, #tpu.memory_space<vmem>>, vector<32x256xbf16>,
    %c241_i32_57 = arith.constant 241 : i32
    %103 = tpu.dynamic_rotate %70 by %c241_i32_57 dim 1 : vector<32x256xf32>, i32 -> vector<32x256xf32>
    %c6_58 = arith.constant 6 : index
    %c0_59 = arith.constant 0 : index
    %104 = vector.load %arg4[%c6_58, %c0_59] : memref<9x256xf32, #tpu.memory_space<vmem>>, vector<1x256xf32>
    %105 = vector.broadcast %104 : vector<1x256xf32> to vector<32x256xf32>
    %106 = arith.mulf %103, %105 : vector<32x256xf32>
    %107 = arith.truncf %106 : vector<32x256xf32> to vector<32x256xbf16>
    %c192 = arith.constant 192 : index
    %c0_60 = arith.constant 0 : index
    %108 = vector.load %arg19[%c192, %c0_60] : memref<288x256xbf16, #tpu.memory_space<vmem>>, vector<32x256xbf16>
    tpu.vector_store %arg19[%c192, %c0_60], %107 {strides = array<i32>} : memref<288x256xbf16, #tpu.memory_space<vmem>>, vector<32x256xbf16>,
    %c240_i32_61 = arith.constant 240 : i32
    %109 = tpu.dynamic_rotate %70 by %c240_i32_61 dim 1 : vector<32x256xf32>, i32 -> vector<32x256xf32>
    %c7_62 = arith.constant 7 : index
    %c0_63 = arith.constant 0 : index
    %110 = vector.load %arg4[%c7_62, %c0_63] : memref<9x256xf32, #tpu.memory_space<vmem>>, vector<1x256xf32>
    %111 = vector.broadcast %110 : vector<1x256xf32> to vector<32x256xf32>
    %112 = arith.mulf %109, %111 : vector<32x256xf32>
    %113 = arith.truncf %112 : vector<32x256xf32> to vector<32x256xbf16>
    %c224 = arith.constant 224 : index
    %c0_64 = arith.constant 0 : index
    %114 = vector.load %arg19[%c224, %c0_64] : memref<288x256xbf16, #tpu.memory_space<vmem>>, vector<32x256xbf16>
    tpu.vector_store %arg19[%c224, %c0_64], %113 {strides = array<i32>} : memref<288x256xbf16, #tpu.memory_space<vmem>>, vector<32x256xbf16>,
    %c239_i32_65 = arith.constant 239 : i32
    %115 = tpu.dynamic_rotate %70 by %c239_i32_65 dim 1 : vector<32x256xf32>, i32 -> vector<32x256xf32>
    %c8_66 = arith.constant 8 : index
    %c0_67 = arith.constant 0 : index
    %116 = vector.load %arg4[%c8_66, %c0_67] : memref<9x256xf32, #tpu.memory_space<vmem>>, vector<1x256xf32>
    %117 = vector.broadcast %116 : vector<1x256xf32> to vector<32x256xf32>
    %118 = arith.mulf %115, %117 : vector<32x256xf32>
    %119 = arith.truncf %118 : vector<32x256xf32> to vector<32x256xbf16>
    %c256 = arith.constant 256 : index
    %c0_68 = arith.constant 0 : index
    %120 = vector.load %arg19[%c256, %c0_68] : memref<288x256xbf16, #tpu.memory_space<vmem>>, vector<32x256xbf16>
    tpu.vector_store %arg19[%c256, %c0_68], %119 {strides = array<i32>} : memref<288x256xbf16, #tpu.memory_space<vmem>>, vector<32x256xbf16>,
    %c0_69 = arith.constant 0 : index
    %c0_70 = arith.constant 0 : index
    %121 = vector.load %arg14[%c0_69, %c0_70] : memref<4x288xbf16, #tpu.memory_space<vmem>>, vector<4x288xbf16>
    %c0_71 = arith.constant 0 : index
    %c0_72 = arith.constant 0 : index
    %122 = vector.load %arg19[%c0_71, %c0_72] : memref<288x256xbf16, #tpu.memory_space<vmem>>, vector<288x256xbf16>
    %cst_73 = arith.constant dense<0.000000e+00> : vector<4x256xf32>
    %123 = tpu.matmul %121, %122, %cst_73 {dimension_numbers = #tpu.dot_dimension_numbers<[1], [0], [0], [1], [0, 0, 1, 1], [], []>} : vector<4x288xbf16>, vector<288x256xbf16>, vector<4x256xf32> -> vector<4x256xf32>
    %c0_74 = arith.constant 0 : index
    %c0_75 = arith.constant 0 : index
    %124 = vector.load %arg15[%c0_74, %c0_75] : memref<4x1xf32, #tpu.memory_space<vmem>>, vector<4x1xf32>
    %125 = vector.broadcast %124 : vector<4x1xf32> to vector<4x256xf32>
    %126 = arith.addf %123, %125 : vector<4x256xf32>
    %c0_76 = arith.constant 0 : index
    %c0_77 = arith.constant 0 : index
    %127 = vector.load %arg16[%c0_76, %c0_77] : memref<2x1xf32, #tpu.memory_space<vmem>>, vector<2x1xf32>
    %128 = vector.extract_strided_slice %126 {offsets = [0, 0], sizes = [2, 256], strides = [1, 1]} : vector<4x256xf32> to vector<2x256xf32>
    %129 = math.tanh %128 : vector<2x256xf32>
    %130 = vector.broadcast %127 : vector<2x1xf32> to vector<2x256xf32>
    %131 = arith.mulf %130, %129 : vector<2x256xf32>
    %132 = vector.extract_strided_slice %126 {offsets = [2, 0], sizes = [2, 256], strides = [1, 1]} : vector<4x256xf32> to vector<2x256xf32>
    %133 = arith.addf %6, %132 : vector<2x256xf32>
    %134 = math.exp %131 : vector<2x256xf32>
    %135 = arith.mulf %133, %134 : vector<2x256xf32>
    %136 = tpu.concatenate %135, %7 in 0 : vector<2x256xf32>, vector<2x256xf32> -> vector<4x256xf32>
    %c0_78 = arith.constant 0 : index
    %c0_79 = arith.constant 0 : index
    %137 = vector.load %arg17[%c0_78, %c0_79] : memref<4x256xf32, #tpu.memory_space<vmem>>, vector<4x256xf32>
    tpu.vector_store %arg17[%c0_78, %c0_79], %136 {strides = array<i32>} : memref<4x256xf32, #tpu.memory_space<vmem>>, vector<4x256xf32>,
    %cst_80 = arith.constant dense<0.000000e+00> : vector<256xf32>
    %138 = vector.multi_reduction <add>, %131, %cst_80 [0] : vector<2x256xf32> to vector<256xf32>
    %139 = vector.shape_cast %138 : vector<256xf32> to vector<1x256xf32>
    %c0_81 = arith.constant 0 : index
    %c0_82 = arith.constant 0 : index
    %140 = vector.load %arg5[%c0_81, %c0_82] : memref<256x1xf32, #tpu.memory_space<vmem>>, vector<256x1xf32>
    %cst_83 = arith.constant dense<0.000000e+00> : vector<1x1xf32>
    %141 = tpu.matmul %139, %140, %cst_83 {dimension_numbers = #tpu.dot_dimension_numbers<[1], [0], [0], [1], [0, 0, 1, 1], [], []>} : vector<1x256xf32>, vector<256x1xf32>, vector<1x1xf32> -> vector<1x1xf32>
    %c0_84 = arith.constant 0 : index
    %c0_85 = arith.constant 0 : index
    %c0_86 = arith.constant 0 : index
    %142 = vector.load %arg18[%c0_84, %c0_85, %c0_86] : memref<1x1x1xf32, #tpu.memory_space<vmem>>, vector<1x1x1xf32>
    %143 = vector.shape_cast %142 : vector<1x1x1xf32> to vector<1x1xf32>
    %144 = vector.shape_cast %141 : vector<1x1xf32> to vector<1x1x1xf32>
    tpu.vector_store %arg18[%c0_84, %c0_85, %c0_86], %144 {strides = array<i32>} : memref<1x1x1xf32, #tpu.memory_space<vmem>>, vector<1x1x1xf32>,
    return
  }
  func.func @transform_0(%arg0: i32) -> (i32, i32) {
    %c0_i32 = arith.constant 0 : i32
    %c0_i32_0 = arith.constant 0 : i32
    return %c0_i32, %arg0 : i32, i32
  }
  func.func @transform_1(%arg0: i32) -> (i32, i32) {
    %c0_i32 = arith.constant 0 : i32
    %c0_i32_0 = arith.constant 0 : i32
    %c0_i32_1 = arith.constant 0 : i32
    return %c0_i32, %c0_i32_0 : i32, i32
  }
  func.func @transform_2(%arg0: i32) -> (i32, i32) {
    %c0_i32 = arith.constant 0 : i32
    %c0_i32_0 = arith.constant 0 : i32
    %c0_i32_1 = arith.constant 0 : i32
    return %c0_i32, %c0_i32_0 : i32, i32
  }
  func.func @transform_3(%arg0: i32) -> (i32, i32) {
    %c0_i32 = arith.constant 0 : i32
    %c0_i32_0 = arith.constant 0 : i32
    %c0_i32_1 = arith.constant 0 : i32
    return %c0_i32, %c0_i32_0 : i32, i32
  }
  func.func @transform_4(%arg0: i32) -> (i32, i32) {
    %c0_i32 = arith.constant 0 : i32
    %c0_i32_0 = arith.constant 0 : i32
    %c0_i32_1 = arith.constant 0 : i32
    return %c0_i32, %c0_i32_0 : i32, i32
  }
  func.func @transform_5(%arg0: i32) -> (i32, i32) {
    %c0_i32 = arith.constant 0 : i32
    %c0_i32_0 = arith.constant 0 : i32
    %c0_i32_1 = arith.constant 0 : i32
    return %c0_i32, %c0_i32_0 : i32, i32
  }
  func.func @transform_6(%arg0: i32) -> (i32, i32) {
    %c0_i32 = arith.constant 0 : i32
    %c0_i32_0 = arith.constant 0 : i32
    %c0_i32_1 = arith.constant 0 : i32
    return %c0_i32, %c0_i32_0 : i32, i32
  }
  func.func @transform_7(%arg0: i32) -> (i32, i32) {
    %c0_i32 = arith.constant 0 : i32
    %c0_i32_0 = arith.constant 0 : i32
    %c0_i32_1 = arith.constant 0 : i32
    return %c0_i32, %c0_i32_0 : i32, i32
  }
  func.func @transform_8(%arg0: i32) -> (i32, i32) {
    %c0_i32 = arith.constant 0 : i32
    %c0_i32_0 = arith.constant 0 : i32
    %c0_i32_1 = arith.constant 0 : i32
    return %c0_i32, %c0_i32_0 : i32, i32
  }
  func.func @transform_9(%arg0: i32) -> (i32, i32) {
    %c0_i32 = arith.constant 0 : i32
    %c0_i32_0 = arith.constant 0 : i32
    %c0_i32_1 = arith.constant 0 : i32
    return %c0_i32, %c0_i32_0 : i32, i32
  }
  func.func @transform_10(%arg0: i32) -> (i32, i32) {
    %c0_i32 = arith.constant 0 : i32
    %c0_i32_0 = arith.constant 0 : i32
    %c0_i32_1 = arith.constant 0 : i32
    return %c0_i32, %c0_i32_0 : i32, i32
  }
  func.func @transform_11(%arg0: i32) -> (i32, i32) {
    %c0_i32 = arith.constant 0 : i32
    %c0_i32_0 = arith.constant 0 : i32
    %c0_i32_1 = arith.constant 0 : i32
    return %c0_i32, %c0_i32_0 : i32, i32
  }
  func.func @transform_12(%arg0: i32) -> (i32, i32) {
    %c0_i32 = arith.constant 0 : i32
    %c0_i32_0 = arith.constant 0 : i32
    %c0_i32_1 = arith.constant 0 : i32
    return %c0_i32, %c0_i32_0 : i32, i32
  }
  func.func @transform_13(%arg0: i32) -> (i32, i32) {
    %c0_i32 = arith.constant 0 : i32
    %c0_i32_0 = arith.constant 0 : i32
    %c0_i32_1 = arith.constant 0 : i32
    return %c0_i32, %c0_i32_0 : i32, i32
  }
  func.func @transform_14(%arg0: i32) -> (i32, i32) {
    %c0_i32 = arith.constant 0 : i32
    %c0_i32_0 = arith.constant 0 : i32
    %c0_i32_1 = arith.constant 0 : i32
    return %c0_i32, %c0_i32_0 : i32, i32
  }
  func.func @transform_15(%arg0: i32) -> (i32, i32) {
    %c0_i32 = arith.constant 0 : i32
    %c0_i32_0 = arith.constant 0 : i32
    %c0_i32_1 = arith.constant 0 : i32
    return %c0_i32, %c0_i32_0 : i32, i32
  }
  func.func @transform_16(%arg0: i32) -> (i32, i32) {
    %c0_i32 = arith.constant 0 : i32
    %c0_i32_0 = arith.constant 0 : i32
    return %c0_i32, %arg0 : i32, i32
  }
  func.func @transform_17(%arg0: i32) -> (i32, i32, i32) {
    %c0_i32 = arith.constant 0 : i32
    %c0_i32_0 = arith.constant 0 : i32
    %c0_i32_1 = arith.constant 0 : i32
    return %arg0, %c0_i32, %c0_i32_0 : i32, i32, i32
  }
}

</mosaic_0001>

<llo_original>
// kernel: custom-call.2
$region0: #{custom-call.2}
  %s0 = inlined_call_operand.vmem [shape: f32[4,4], index: 0, kind: input, shape index: {}]
  %s1 = inlined_call_operand.vmem [shape: f32[4,4], index: 1, kind: output, shape index: {0}]
  %s2 = inlined_call_operand.hbm [shape: s32[4], index: 2, kind: output, shape index: {1}]
  %s3 = inlined_call_operand.hbm [shape: s32[4], index: 3, kind: output, shape index: {2}]
  %4 = xla_tuple %s1, %s2, %s3
  $region1: #{custom-call.2} parent=0
    #allocation0 [shape = 'u8[4096]{0}', space=vmem, size = 0x1000, scoped, tag = 'operand span for operand 0']
    #allocation1 [shape = 'u8[2048]{0}', space=vmem, size = 0x800, scoped, tag = 'packed  for operand 0']
    #allocation2 [shape = 'u8[4096]{0}', space=vmem, size = 0x1000, scoped, tag = 'operand span for operand 1']
    #allocation3 [shape = 'u8[2048]{0}', space=vmem, size = 0x800, scoped, tag = 'packed  for operand 1']
    #allocation4 [shape = 'u8[4096]{0}', space=vmem, size = 0x1000, scoped, tag = 'operand span for operand 2']
    #allocation5 [shape = 'u8[512]{0}', space=vmem, size = 0x400, scoped, tag = 'packed  for operand 2']
    #allocation6 [shape = 's32[1]{0}', space=sflag, size = 0x4, scoped, tag = 'scoped memory for custom-call.2']
    #allocation7 [shape = 'u8[4096]{0}', space=vmem, size = 0x1000, scoped, tag = 'operand span for operand 3']
    #allocation8 [shape = 'u8[512]{0}', space=vmem, size = 0x400, scoped, tag = 'packed  for operand 3']
    #allocation9 [shape = 's32[1]{0}', space=sflag, size = 0x4, scoped, tag = 'scoped memory for custom-call.2']
    #allocation10 [shape = 's32[4,128]{1,0}', space=vmem, size = 0x1000, scoped, tag = 'scratch for permutations']
    %5 = vsyncpa [#allocation6], 0
    %6 = vsyncpa [#allocation9], 0
    // Predicated region
    $region2: #{custom-call.2} parent=1 // pred_check
      _
    $region3: #{custom-call.2} parent=1 // pred_check_branch
      %8 = sbr.rel (0) target = $region5
    $region4: #{custom-call.2} parent=1 // pred_region
      %p10 = scmp.gt.s32.totalorder 0, 0
      // Predicated region
      $region6: #{custom-call.2} parent=4 // pred_check
        %p11 = pneg %p10
      $region7: #{custom-call.2} parent=4 // pred_check_branch
        %13 = sbr.rel (%p11) target = $region9
      $region8: #{custom-call.2} parent=4 // pred_region
        %s14 = ssub.s32 0, 1
        %s15 = smul.u32 %s14, 8
        %s16 = scalar_lea.vmem %s0, %s15
        %v17 = vld [vmem:[%s0] sm:$0xff]
        // While loop
        $region10: #{custom-call.2} parent=8 // loop_pre_header
          _
        $region11: #{custom-call.2} parent=8 // loop_header
          %s18 = sphi %s0, %s40
          %s19 = sphi [#allocation1], %s41
          %v20 = vphi %v17, %v42
          %s21 = ssub.s32 %s16, 64
          %p22 = scmp.gt.s32.totalorder %s18, %s21
        $region12: #{custom-call.2} parent=8 // loop_header_branch
          %24 = sbr.rel (%p22) target = $region16
        $region13: #{custom-call.2} parent=8 // loop_body
          %25 = vst [vmem:[%s19] sm:$0xff] %v20
          %v26 = vld [vmem:[%s18 + $0x8] sm:$0xff]
          %27 = vst [vmem:[%s19 + $0x8] sm:$0xff] %v26
          %v28 = vld [vmem:[%s18 + $0x10] sm:$0xff]
          %29 = vst [vmem:[%s19 + $0x10] sm:$0xff] %v28
          %v30 = vld [vmem:[%s18 + $0x18] sm:$0xff]
          %31 = vst [vmem:[%s19 + $0x18] sm:$0xff] %v30
          %v32 = vld [vmem:[%s18 + $0x20] sm:$0xff]
          %33 = vst [vmem:[%s19 + $0x20] sm:$0xff] %v32
          %v34 = vld [vmem:[%s18 + $0x28] sm:$0xff]
          %35 = vst [vmem:[%s19 + $0x28] sm:$0xff] %v34
          %v36 = vld [vmem:[%s18 + $0x30] sm:$0xff]
          %37 = vst [vmem:[%s19 + $0x30] sm:$0xff] %v36
          %v38 = vld [vmem:[%s18 + $0x38] sm:$0xff]
          %39 = vst [vmem:[%s19 + $0x38] sm:$0xff] %v38
        $region14: #{custom-call.2} parent=8 // loop_footer
          %s40 = scalar_lea.vmem %s18, 64
          %s41 = scalar_lea.vmem %s19, 64
          %v42 = vld [vmem:[%s18 + $0x40] sm:$0xff]
        $region15: #{custom-call.2} parent=8 // loop_footer_branch
          %43 = sbr.rel target = $region11
        $region16: #{custom-call.2} parent=8 // loop_exit
          _
        // While loop
        $region17: #{custom-call.2} parent=8 // loop_pre_header
          _
        $region18: #{custom-call.2} parent=8 // loop_header
          %s44 = sphi %s18, %s52
          %s45 = sphi %s19, %s53
          %v46 = vphi %v20, %v46
          %p47 = scmp.gt.s32.totalorder %s44, %s16
        $region19: #{custom-call.2} parent=8 // loop_header_branch
          %49 = sbr.rel (%p47) target = $region23
        $region20: #{custom-call.2} parent=8 // loop_body
          %v50 = vld [vmem:[%s44] sm:$0xff]
          %51 = vst [vmem:[%s45] sm:$0xff] %v50
        $region21: #{custom-call.2} parent=8 // loop_footer
          %s52 = scalar_lea.vmem %s44, 8
          %s53 = scalar_lea.vmem %s45, 8
        $region22: #{custom-call.2} parent=8 // loop_footer_branch
          %54 = sbr.rel target = $region18
        $region23: #{custom-call.2} parent=8 // loop_exit
          _
      $region9: #{custom-call.2} parent=4 // pred_fallthru
        _
      %s56 = ssub.s32 16, 1
      %s57 = smul.u32 0, 8
      %s58 = scalar_lea.vmem [#allocation1], %s57
      %s59 = smul.u32 0, 8
      %s60 = scalar_lea.vmem %s0, %s59
      %v61 = vld [vmem:[%s60] sm:%s56]
      %62 = vst [vmem:[%s58] sm:%s56] %v61
    $region5: #{custom-call.2} parent=1 // pred_fallthru
      _
    %s64 = ssub.s32 16, 1
    %v65 = vld [vmem:[#allocation1] sm:%s64]
    %66 = vst [vmem:[#allocation0] sm:%s64] %v65
    %v67 = vld [vmem:[#allocation0] sm:$0xff]
    %68 = vst [vmem:[#allocation2] sm:$0xff] %v67
    %69 = vst [vmem:[#allocation4] sm:$0x1] 0
    %v70 = vlaneseq
    %v71 = vshrl.u32 %v70, 7
    %v72 = vmov %v71
    %74 = vst [vmem:[#allocation10] sm:$0xff] %v72
    loop: start=0, step=1, limit=4
    $region25: #{custom-call.2} parent=1 // loop_pre_header
      _
    $region26: #{custom-call.2} parent=1 // loop_header
      %s76 = sphi 0, %s80
      %p77 = scmp.ge.s32.totalorder %s76, 4
    $region27: #{custom-call.2} parent=1 // loop_header_branch
      %79 = sbr.rel (%p77) target = $region31
    $region28: #{custom-call.2} parent=1 // loop_body
      %v81 = vstv %s76
      %v82 = vlaneseq
      %v83 = vshrl.u32 %v82, 7
      %v84 = vmov %v83
      %v85 = vld [vmem:[#allocation2] sm:$0xff]
      %v86 = vand.u32 2147483647, %v85
      %v88 = vstv %s76
      %vm89 = vcmp.ge.s32.totalorder %v84, %v88
      %vm90 = vcmp.lt.s32.totalorder %v84, 4
      %vm91 = vmand %vm89, %vm90
      %vm92 = vcmp.lt.f32.partialorder -inf, %v86
      %vm93 = vmand %vm91, %vm92
      %v94 = vsel %vm93, %v84, %v81
      %v95 = vsel %vm93, %v86, -inf
      %v96 = vrot.slane %v95, 1
      %v97 = vrot.slane %v94, 1
      %vm98 = vcmp.ge.f32.partialorder %v96, %v95
      %v99 = vsel %vm98, %v96, %v95
      %v100 = vsel %vm98, %v97, %v94
      %v101 = vrot.slane %v96, 1
      %v102 = vrot.slane %v97, 1
      %vm103 = vcmp.ge.f32.partialorder %v101, %v99
      %v104 = vsel %vm103, %v101, %v99
      %v105 = vsel %vm103, %v102, %v100
      %v106 = vrot.slane %v101, 1
      %v107 = vrot.slane %v102, 1
      %vm108 = vcmp.ge.f32.partialorder %v106, %v104
      %v109 = vsel %vm108, %v106, %v104
      %v110 = vsel %vm108, %v107, %v105
      %v111 = vrot.slane %v106, 1
      %v112 = vrot.slane %v107, 1
      %vm113 = vcmp.ge.f32.partialorder %v111, %v109
      %v114 = vsel %vm113, %v111, %v109
      %v115 = vsel %vm113, %v112, %v110
      %v116 = vrot.slane %v111, 1
      %v117 = vrot.slane %v112, 1
      %vm118 = vcmp.ge.f32.partialorder %v116, %v114
      %v119 = vsel %vm118, %v116, %v114
      %v120 = vsel %vm118, %v117, %v115
      %v121 = vrot.slane %v116, 1
      %v122 = vrot.slane %v117, 1
      %vm123 = vcmp.ge.f32.partialorder %v121, %v119
      %v124 = vsel %vm123, %v121, %v119
      %v125 = vsel %vm123, %v122, %v120
      %v126 = vrot.slane %v121, 1
      %v127 = vrot.slane %v122, 1
      %vm128 = vcmp.ge.f32.partialorder %v126, %v124
      %v129 = vsel %vm128, %v126, %v124
      %v130 = vsel %vm128, %v127, %v125
      %s131 = ssub.s32 128, %s76
      %132 = vrot.lane.b32.xlu0 %v130, %s131
      %v133 = vpop.permute.xlu0 %132
      %s134 = vtos %v133
      %v135 = vstv %s76
      %v136 = vlaneseq
      %v137 = vand.u32 %v136, 127
      %vm138 = vcmp.eq.s32.totalorder %v137, %v135
      %v139 = vstv %s134
      %v140 = vld [vmem:[#allocation4] ss:$0 sm:$0xff]
      %v141 = vsel %vm138, %v139, %v140
      %142 = vst [vmem:[#allocation4] sm:$0x1] %v141
      %s143 = scalar_lea.vmem [#allocation2], %s76
      %s144 = scalar_lea.vmem [#allocation2], %s134
      %v145 = vld [vmem:[%s143] ss:$0 sm:$0xff]
      %v146 = vld [vmem:[%s144] ss:$0 sm:$0xff]
      %147 = vst [vmem:[%s144] sm:$0x1] %v145
      %148 = vst [vmem:[%s143] sm:$0x1] %v146
      %s149 = scalar_lea.vmem [#allocation10], %s76
      %s150 = scalar_lea.vmem [#allocation10], %s134
      %v151 = vld [vmem:[%s149] ss:$0 sm:$0xff]
      %v152 = vld [vmem:[%s150] ss:$0 sm:$0xff]
      %153 = vst [vmem:[%s150] sm:$0x1] %v151
      %154 = vst [vmem:[%s149] sm:$0x1] %v152
      %vm155 = vcmp.ne.f32.partialorder %v146, 0.0
      %vm156 = vmand %vm138, %vm155
      %v157 = vsel %vm156, %v146, 1.0
      %v158 = vlaneseq
      %v159 = vand.u32 %v158, 127
      %v160 = vstv %s76
      %vm161 = vcmp.gt.s32.totalorder %v159, %v160
      %v162 = vsel %vm161, %v146, 0.0
      %v163 = vlaneseq
      %v164 = vshrl.u32 %v163, 7
      %v165 = vmov %v164
      %v166 = vld [vmem:[#allocation2] sm:$0xff]
      %v168 = vstv %s76
      %vm169 = vcmp.gt.s32.totalorder %v165, %v168
      %v170 = vsel %vm169, %v157, 1.0
      %v171 = vrcp.pop %v170
      %v172 = vmul.f32 %v170, %v171
      %v173 = vsub.f32 1.0, %v172
      %v174 = vmul.f32 %v171, %v173
      %v175 = vadd.f32 %v171, %v174
      %vm176 = vweird.f32 %v170
      %vm177 = vweird.f32 %v171
      %vm178 = vmor %vm176, %vm177
      %v179 = vsel %vm178, %v171, %v175
      %v180 = vand.u32 2147483647, %v170
      %vm181 = vcmp.eq.f32.partialorder %v180, 8.507059e+37
      %v182 = vand.u32 %v170, 2147483648
      %v183 = vor.u32 1.1754944e-38, %v182
      %v184 = vsel %vm181, %v183, %v179
      %v185 = vmul.f32 %v166, %v184
      %vm186 = vmand %vm169, %vm138
      %v187 = vsel %vm186, %v185, 0.0
      %188 = vadd.xlane.f32.xlu0 %v187
      %v189 = vpop.xlane.xlu0 %188
      %v190 = vmul.f32 %v189, %v162
      %v191 = vsub.f32 %v185, %v190
      %192 = vst [vmem:[#allocation2] sm:$0xff] %v191
    $region29: #{custom-call.2} parent=1 // loop_footer
      %s80 = sadd.s32 1, %s76
    $region30: #{custom-call.2} parent=1 // loop_footer_branch
      %75 = sbr.rel target = $region26
    $region31: #{custom-call.2} parent=1 // loop_exit
      _
    %v193 = vld [vmem:[#allocation10] sm:$0xff]
    %s194 = scalar_lea.vmem [#allocation10], 8
    %s195 = scalar_lea.vmem [#allocation10], 16
    %s196 = scalar_lea.vmem [#allocation10], 24
    %s197 = scalar_lea.vmem [#allocation10], 32
    %s198 = scalar_lea.vmem [#allocation10], 40
    %s199 = scalar_lea.vmem [#allocation10], 48
    %s200 = scalar_lea.vmem [#allocation10], 56
    %s201 = scalar_lea.vmem [#allocation10], 64
    %s202 = scalar_lea.vmem [#allocation10], 72
    %s203 = scalar_lea.vmem [#allocation10], 80
    %s204 = scalar_lea.vmem [#allocation10], 88
    %s205 = scalar_lea.vmem [#allocation10], 96
    %s206 = scalar_lea.vmem [#allocation10], 104
    %s207 = scalar_lea.vmem [#allocation10], 112
    %s208 = scalar_lea.vmem [#allocation10], 120
    %209 = vxpose.xlu0.b32.start [1/16] %v193, 128
    %210 = vxpose.xlu0.b32.cont [2/16] 0, 128
    %211 = vxpose.xlu0.b32.cont [3/16] 0, 128
    %212 = vxpose.xlu0.b32.cont [4/16] 0, 128
    %213 = vxpose.xlu0.b32.cont [5/16] 0, 128
    %214 = vxpose.xlu0.b32.cont [6/16] 0, 128
    %215 = vxpose.xlu0.b32.cont [7/16] 0, 128
    %216 = vxpose.xlu0.b32.cont [8/16] 0, 128
    %217 = vxpose.xlu0.b32.cont [9/16] 0, 128
    %218 = vxpose.xlu0.b32.cont [10/16] 0, 128
    %219 = vxpose.xlu0.b32.cont [11/16] 0, 128
    %220 = vxpose.xlu0.b32.cont [12/16] 0, 128
    %221 = vxpose.xlu0.b32.cont [13/16] 0, 128
    %222 = vxpose.xlu0.b32.cont [14/16] 0, 128
    %223 = vxpose.xlu0.b32.cont [15/16] 0, 128
    %224 = vxpose.xlu0.b32.end [16/16] 0, 128
    %v225 = vpop.trf.xlu0
    %v226 = vpop.trf.xlu0
    %v227 = vpop.trf.xlu0
    %v228 = vpop.trf.xlu0
    %v229 = vpop.trf.xlu0
    %v230 = vpop.trf.xlu0
    %v231 = vpop.trf.xlu0
    %v232 = vpop.trf.xlu0
    %v233 = vpop.trf.xlu0
    %v234 = vpop.trf.xlu0
    %v235 = vpop.trf.xlu0
    %v236 = vpop.trf.xlu0
    %v237 = vpop.trf.xlu0
    %v238 = vpop.trf.xlu0
    %v239 = vpop.trf.xlu0
    %v240 = vpop.trf.xlu0
    %241 = vst [vmem:[#allocation7] sm:$0x1] %v225
    %s243 = ssub.s32 16, 1
    %v244 = vld [vmem:[#allocation2] sm:%s243]
    %s246 = ssub.s32 16, 1
    %247 = vst [vmem:[#allocation3] sm:%s246] %v244
    %s249 = ssub.s32 2, 1
    %v250 = vld [vmem:[#allocation4] sm:%s249]
    %s252 = ssub.s32 2, 1
    %253 = vst [vmem:[#allocation5] sm:%s252] %v250
    %s255 = ssub.s32 2, 1
    %v256 = vld [vmem:[#allocation7] sm:%s255]
    %s258 = ssub.s32 2, 1
    %259 = vst [vmem:[#allocation8] sm:%s258] %v256
    // Predicated region
    $region32: #{custom-call.2} parent=1 // pred_check
      _
    $region33: #{custom-call.2} parent=1 // pred_check_branch
      %261 = sbr.rel (0) target = $region35
    $region34: #{custom-call.2} parent=1 // pred_region
      %p263 = scmp.gt.s32.totalorder 0, 0
      // Predicated region
      $region36: #{custom-call.2} parent=34 // pred_check
        %p264 = pneg %p263
      $region37: #{custom-call.2} parent=34 // pred_check_branch
        %266 = sbr.rel (%p264) target = $region39
      $region38: #{custom-call.2} parent=34 // pred_region
        %s267 = ssub.s32 0, 1
        %s268 = smul.u32 %s267, 8
        %s269 = scalar_lea.vmem [#allocation3], %s268
        %v270 = vld [vmem:[#allocation3] sm:$0xff]
        // While loop
        $region40: #{custom-call.2} parent=38 // loop_pre_header
          _
        $region41: #{custom-call.2} parent=38 // loop_header
          %s271 = sphi [#allocation3], %s293
          %s272 = sphi %s1, %s294
          %v273 = vphi %v270, %v295
          %s274 = ssub.s32 %s269, 64
          %p275 = scmp.gt.s32.totalorder %s271, %s274
        $region42: #{custom-call.2} parent=38 // loop_header_branch
          %277 = sbr.rel (%p275) target = $region46
        $region43: #{custom-call.2} parent=38 // loop_body
          %278 = vst [vmem:[%s272] sm:$0xff] %v273
          %v279 = vld [vmem:[%s271 + $0x8] sm:$0xff]
          %280 = vst [vmem:[%s272 + $0x8] sm:$0xff] %v279
          %v281 = vld [vmem:[%s271 + $0x10] sm:$0xff]
          %282 = vst [vmem:[%s272 + $0x10] sm:$0xff] %v281
          %v283 = vld [vmem:[%s271 + $0x18] sm:$0xff]
          %284 = vst [vmem:[%s272 + $0x18] sm:$0xff] %v283
          %v285 = vld [vmem:[%s271 + $0x20] sm:$0xff]
          %286 = vst [vmem:[%s272 + $0x20] sm:$0xff] %v285
          %v287 = vld [vmem:[%s271 + $0x28] sm:$0xff]
          %288 = vst [vmem:[%s272 + $0x28] sm:$0xff] %v287
          %v289 = vld [vmem:[%s271 + $0x30] sm:$0xff]
          %290 = vst [vmem:[%s272 + $0x30] sm:$0xff] %v289
          %v291 = vld [vmem:[%s271 + $0x38] sm:$0xff]
          %292 = vst [vmem:[%s272 + $0x38] sm:$0xff] %v291
        $region44: #{custom-call.2} parent=38 // loop_footer
          %s293 = scalar_lea.vmem %s271, 64
          %s294 = scalar_lea.vmem %s272, 64
          %v295 = vld [vmem:[%s271 + $0x40] sm:$0xff]
        $region45: #{custom-call.2} parent=38 // loop_footer_branch
          %296 = sbr.rel target = $region41
        $region46: #{custom-call.2} parent=38 // loop_exit
          _
        // While loop
        $region47: #{custom-call.2} parent=38 // loop_pre_header
          _
        $region48: #{custom-call.2} parent=38 // loop_header
          %s297 = sphi %s271, %s305
          %s298 = sphi %s272, %s306
          %v299 = vphi %v273, %v299
          %p300 = scmp.gt.s32.totalorder %s297, %s269
        $region49: #{custom-call.2} parent=38 // loop_header_branch
          %302 = sbr.rel (%p300) target = $region53
        $region50: #{custom-call.2} parent=38 // loop_body
          %v303 = vld [vmem:[%s297] sm:$0xff]
          %304 = vst [vmem:[%s298] sm:$0xff] %v303
        $region51: #{custom-call.2} parent=38 // loop_footer
          %s305 = scalar_lea.vmem %s297, 8
          %s306 = scalar_lea.vmem %s298, 8
        $region52: #{custom-call.2} parent=38 // loop_footer_branch
          %307 = sbr.rel target = $region48
        $region53: #{custom-call.2} parent=38 // loop_exit
          _
      $region39: #{custom-call.2} parent=34 // pred_fallthru
        _
      %s309 = ssub.s32 16, 1
      %s310 = smul.u32 0, 8
      %s311 = scalar_lea.vmem %s1, %s310
      %s312 = smul.u32 0, 8
      %s313 = scalar_lea.vmem [#allocation3], %s312
      %v314 = vld [vmem:[%s313] sm:%s309]
      %315 = vst [vmem:[%s311] sm:%s309] %v314
    $region35: #{custom-call.2} parent=1 // pred_fallthru
      _
    // Predicated region
    $region54: #{custom-call.2} parent=1 // pred_check
      _
    $region55: #{custom-call.2} parent=1 // pred_check_branch
      %317 = sbr.rel (0) target = $region57
    $region56: #{custom-call.2} parent=1 // pred_region
      %319 = vsyncadd [#allocation6], 0
      %s321 = sshll.u32 [#allocation5], 4
      %s322 = int_to_ptr.vmem [resolvable:$true] %s321
      %s323 = sshll.u32 %s2, 4
      %s324 = int_to_ptr.hbm [resolvable:$true] %s323
      %326 = dma.vmem_to_hbm [thread:$0]  %s322, 16, %s324, [#allocation6]
    $region57: #{custom-call.2} parent=1 // pred_fallthru
      _
    // Predicated region
    $region58: #{custom-call.2} parent=1 // pred_check
      _
    $region59: #{custom-call.2} parent=1 // pred_check_branch
      %328 = sbr.rel (0) target = $region61
    $region60: #{custom-call.2} parent=1 // pred_region
      %330 = vsyncadd [#allocation9], 0
      %s332 = sshll.u32 [#allocation8], 4
      %s333 = int_to_ptr.vmem [resolvable:$true] %s332
      %s334 = sshll.u32 %s3, 4
      %s335 = int_to_ptr.hbm [resolvable:$true] %s334
      %337 = dma.vmem_to_hbm [thread:$0]  %s333, 16, %s335, [#allocation9]
    $region61: #{custom-call.2} parent=1 // pred_fallthru
      _
    // Predicated region
    $region62: #{custom-call.2} parent=1 // pred_check
      _
    $region63: #{custom-call.2} parent=1 // pred_check_branch
      %339 = sbr.rel (0) target = $region65
    $region64: #{custom-call.2} parent=1 // pred_region
      %341 = dma.done [#allocation6], 16
    $region65: #{custom-call.2} parent=1 // pred_fallthru
      _
    // Predicated region
    $region66: #{custom-call.2} parent=1 // pred_check
      _
    $region67: #{custom-call.2} parent=1 // pred_check_branch
      %343 = sbr.rel (0) target = $region69
    $region68: #{custom-call.2} parent=1 // pred_region
      %345 = dma.done [#allocation9], 16
    $region69: #{custom-call.2} parent=1 // pred_fallthru
      _
    %346 = vsyncpa [#allocation6], 1
    %347 = vsyncpa [#allocation9], 1

// kernel: flow_step_forward.1
$region0: #{flow_step_forward.1}
  #allocation0 [shape = 'u32[]', space=smem, size = 0x4, offset = 0x4, fixed_abs, tag = 'smem constant byte address 0x4 - core index']
  #allocation1 [shape = 'u32[72,128]{1,0:T(1,128)}', space=vmem, size = 0x9000, scoped, tag = 'internal scratch']
  #allocation2 [shape = 'bf16[288,256]{1,0:T(8,128)(2,1)}', space=vmem, size = 0x24000, scoped, tag = 'scratch operand']
  %s0 = inlined_call_operand.vmem [shape: f32[4,512], index: 0, kind: input, shape index: {}]
  %s1 = inlined_call_operand.vmem [shape: f32[4,4], index: 1, kind: input, shape index: {}]
  %s2 = inlined_call_operand.vmem [shape: f32[4,1], index: 2, kind: input, shape index: {}]
  %s3 = inlined_call_operand.vmem [shape: f32[9,256], index: 3, kind: input, shape index: {}]
  %s4 = inlined_call_operand.vmem [shape: f32[256,1], index: 4, kind: input, shape index: {}]
  %s5 = inlined_call_operand.vmem [shape: f32[2,1], index: 5, kind: input, shape index: {}]
  %s6 = inlined_call_operand.vmem [shape: f32[2,1], index: 6, kind: input, shape index: {}]
  %s7 = inlined_call_operand.vmem [shape: bf16[32,18], index: 7, kind: input, shape index: {}]
  %s8 = inlined_call_operand.vmem [shape: f32[32,1], index: 8, kind: input, shape index: {}]
  %s9 = inlined_call_operand.vmem [shape: f32[32,1], index: 9, kind: input, shape index: {}]
  %s10 = inlined_call_operand.vmem [shape: bf16[32,32], index: 10, kind: input, shape index: {}]
  %s11 = inlined_call_operand.vmem [shape: f32[32,1], index: 11, kind: input, shape index: {}]
  %s12 = inlined_call_operand.vmem [shape: f32[32,1], index: 12, kind: input, shape index: {}]
  %s13 = inlined_call_operand.vmem [shape: bf16[4,288], index: 13, kind: input, shape index: {}]
  %s14 = inlined_call_operand.vmem [shape: f32[4,1], index: 14, kind: input, shape index: {}]
  %s15 = inlined_call_operand.vmem [shape: f32[2,1], index: 15, kind: input, shape index: {}]
  %s16 = inlined_call_operand.vmem [shape: f32[4,512], index: 16, kind: output, shape index: {0}]
  %s17 = inlined_call_operand.vmem [shape: f32[2,1,1], index: 17, kind: output, shape index: {1}]
  %18 = xla_tuple %s16, %s17
  %s19 = sld [smem:[#allocation0]]
  $region105: #{flow_step_forward.1} parent=0
    _
  %s21 = ssub.s32 1, %s19
  %s22 = scalar_select 0, %s21, %s19
  loop: start=0, step=1, limit=4
  $region2: #{flow_step_forward.1} parent=0 // loop_pre_header
    _
  $region3: #{flow_step_forward.1} parent=0 // loop_header
    %s24 = sphi 0, %s28
    %p25 = scmp.ge.s32.totalorder %s24, 4
    %s34 = sphi 0, %s36
    %s37 = sphi 0, %s34
    %s38 = sphi 0, %s37
    %s54 = sphi 0, %s38
    %s58 = sphi 0, %s58
    %s60 = sphi 0, %s58
    %s61 = sphi 0, %s60
    %s75 = sphi 0, %s61
    %s79 = sphi 0, %s79
    %s81 = sphi 0, %s79
    %s82 = sphi 0, %s81
    %s96 = sphi 0, %s82
    %s100 = sphi 0, %s100
    %s102 = sphi 0, %s100
    %s103 = sphi 0, %s102
    %s117 = sphi 0, %s103
    %s121 = sphi 0, %s121
    %s123 = sphi 0, %s121
    %s124 = sphi 0, %s123
    %s138 = sphi 0, %s124
    %s142 = sphi 0, %s142
    %s144 = sphi 0, %s142
    %s145 = sphi 0, %s144
    %s159 = sphi 0, %s145
    %s163 = sphi 0, %s163
    %s165 = sphi 0, %s163
    %s166 = sphi 0, %s165
    %s180 = sphi 0, %s166
    %s184 = sphi 0, %s184
    %s186 = sphi 0, %s184
    %s187 = sphi 0, %s186
    %s201 = sphi 0, %s187
    %s205 = sphi 0, %s205
    %s207 = sphi 0, %s205
    %s208 = sphi 0, %s207
    %s222 = sphi 0, %s208
    %s226 = sphi 0, %s226
    %s228 = sphi 0, %s226
    %s229 = sphi 0, %s228
    %s243 = sphi 0, %s229
    %s247 = sphi 0, %s247
    %s249 = sphi 0, %s247
    %s250 = sphi 0, %s249
    %s264 = sphi 0, %s250
    %s268 = sphi 0, %s268
    %s270 = sphi 0, %s268
    %s271 = sphi 0, %s270
    %s285 = sphi 0, %s271
    %s289 = sphi 0, %s289
    %s291 = sphi 0, %s289
    %s292 = sphi 0, %s291
    %s306 = sphi 0, %s292
    %s310 = sphi 0, %s310
    %s312 = sphi 0, %s310
    %s313 = sphi 0, %s312
    %s327 = sphi 0, %s313
    %s331 = sphi 0, %s331
    %s333 = sphi 0, %s331
    %s334 = sphi 0, %s333
    %s348 = sphi 0, %s334
    %s352 = sphi 0, %s352
    %s354 = sphi 0, %s352
    %s355 = sphi 0, %s354
    %s369 = sphi 0, %s355
    %s375 = sphi 0, %s377
    %s378 = sphi 0, %s375
    %s379 = sphi 0, %s378
    %s395 = sphi 0, %s379
    %s401 = sphi 0, %s403
    %s404 = sphi 0, %s401
    %s405 = sphi 0, %s404
    %s421 = sphi 0, %s405
  $region4: #{flow_step_forward.1} parent=0 // loop_header_branch
    %27 = sbr.rel (%p25) target = $region8
  $region5: #{flow_step_forward.1} parent=0 // loop_body
    %s29 = ssub.s32 %s24, 1
    %s30 = ssub.s32 %s24, 2
    %s31 = sadd.s32 %s24, 1
    %s32 = ssub.s32 %s24, %s31
    %p33 = scmp.eq.s32.totalorder %s32, 0
    %s35 = sadd.s32 %s34, 1
    %s36 = scalar_select %p33, %s34, %s35
    %p39 = pneg %p33
    %p40 = scmp.eq.s32.totalorder %s24, 1
    %p41 = por %p39, %p40
    %p42 = scmp.ne.s32.totalorder %s34, %s37
    %p43 = scmp.eq.s32.totalorder %s24, 0
    %p44 = por %p42, %p43
    %p45 = scmp.ne.s32.totalorder %s34, %s37
    %p46 = scmp.eq.s32.totalorder %s29, 1
    %p47 = por %p45, %p46
    %p48 = scmp.ne.s32.totalorder %s37, %s38
    %p49 = scmp.eq.s32.totalorder %s29, 0
    %p50 = por %p48, %p49
    %p51 = scmp.ne.s32.totalorder %s37, %s38
    %p52 = scmp.eq.s32.totalorder %s30, 1
    %p53 = por %p51, %p52
    %p55 = scmp.ne.s32.totalorder %s38, %s54
    %p56 = scmp.eq.s32.totalorder %s30, 0
    %p57 = por %p55, %p56
    %s59 = sadd.s32 %s58, 1
    %p62 = scmp.eq.s32.totalorder %s24, 1
    %p63 = scmp.ne.s32.totalorder %s58, %s60
    %p64 = scmp.eq.s32.totalorder %s24, 0
    %p65 = por %p63, %p64
    %p66 = scmp.ne.s32.totalorder %s58, %s60
    %p67 = scmp.eq.s32.totalorder %s29, 1
    %p68 = por %p66, %p67
    %p69 = scmp.ne.s32.totalorder %s60, %s61
    %p70 = scmp.eq.s32.totalorder %s29, 0
    %p71 = por %p69, %p70
    %p72 = scmp.ne.s32.totalorder %s60, %s61
    %p73 = scmp.eq.s32.totalorder %s30, 1
    %p74 = por %p72, %p73
    %p76 = scmp.ne.s32.totalorder %s61, %s75
    %p77 = scmp.eq.s32.totalorder %s30, 0
    %p78 = por %p76, %p77
    %s80 = sadd.s32 %s79, 1
    %p83 = scmp.eq.s32.totalorder %s24, 1
    %p84 = scmp.ne.s32.totalorder %s79, %s81
    %p85 = scmp.eq.s32.totalorder %s24, 0
    %p86 = por %p84, %p85
    %p87 = scmp.ne.s32.totalorder %s79, %s81
    %p88 = scmp.eq.s32.totalorder %s29, 1
    %p89 = por %p87, %p88
    %p90 = scmp.ne.s32.totalorder %s81, %s82
    %p91 = scmp.eq.s32.totalorder %s29, 0
    %p92 = por %p90, %p91
    %p93 = scmp.ne.s32.totalorder %s81, %s82
    %p94 = scmp.eq.s32.totalorder %s30, 1
    %p95 = por %p93, %p94
    %p97 = scmp.ne.s32.totalorder %s82, %s96
    %p98 = scmp.eq.s32.totalorder %s30, 0
    %p99 = por %p97, %p98
    %s101 = sadd.s32 %s100, 1
    %p104 = scmp.eq.s32.totalorder %s24, 1
    %p105 = scmp.ne.s32.totalorder %s100, %s102
    %p106 = scmp.eq.s32.totalorder %s24, 0
    %p107 = por %p105, %p106
    %p108 = scmp.ne.s32.totalorder %s100, %s102
    %p109 = scmp.eq.s32.totalorder %s29, 1
    %p110 = por %p108, %p109
    %p111 = scmp.ne.s32.totalorder %s102, %s103
    %p112 = scmp.eq.s32.totalorder %s29, 0
    %p113 = por %p111, %p112
    %p114 = scmp.ne.s32.totalorder %s102, %s103
    %p115 = scmp.eq.s32.totalorder %s30, 1
    %p116 = por %p114, %p115
    %p118 = scmp.ne.s32.totalorder %s103, %s117
    %p119 = scmp.eq.s32.totalorder %s30, 0
    %p120 = por %p118, %p119
    %s122 = sadd.s32 %s121, 1
    %p125 = scmp.eq.s32.totalorder %s24, 1
    %p126 = scmp.ne.s32.totalorder %s121, %s123
    %p127 = scmp.eq.s32.totalorder %s24, 0
    %p128 = por %p126, %p127
    %p129 = scmp.ne.s32.totalorder %s121, %s123
    %p130 = scmp.eq.s32.totalorder %s29, 1
    %p131 = por %p129, %p130
    %p132 = scmp.ne.s32.totalorder %s123, %s124
    %p133 = scmp.eq.s32.totalorder %s29, 0
    %p134 = por %p132, %p133
    %p135 = scmp.ne.s32.totalorder %s123, %s124
    %p136 = scmp.eq.s32.totalorder %s30, 1
    %p137 = por %p135, %p136
    %p139 = scmp.ne.s32.totalorder %s124, %s138
    %p140 = scmp.eq.s32.totalorder %s30, 0
    %p141 = por %p139, %p140
    %s143 = sadd.s32 %s142, 1
    %p146 = scmp.eq.s32.totalorder %s24, 1
    %p147 = scmp.ne.s32.totalorder %s142, %s144
    %p148 = scmp.eq.s32.totalorder %s24, 0
    %p149 = por %p147, %p148
    %p150 = scmp.ne.s32.totalorder %s142, %s144
    %p151 = scmp.eq.s32.totalorder %s29, 1
    %p152 = por %p150, %p151
    %p153 = scmp.ne.s32.totalorder %s144, %s145
    %p154 = scmp.eq.s32.totalorder %s29, 0
    %p155 = por %p153, %p154
    %p156 = scmp.ne.s32.totalorder %s144, %s145
    %p157 = scmp.eq.s32.totalorder %s30, 1
    %p158 = por %p156, %p157
    %p160 = scmp.ne.s32.totalorder %s145, %s159
    %p161 = scmp.eq.s32.totalorder %s30, 0
    %p162 = por %p160, %p161
    %s164 = sadd.s32 %s163, 1
    %p167 = scmp.eq.s32.totalorder %s24, 1
    %p168 = scmp.ne.s32.totalorder %s163, %s165
    %p169 = scmp.eq.s32.totalorder %s24, 0
    %p170 = por %p168, %p169
    %p171 = scmp.ne.s32.totalorder %s163, %s165
    %p172 = scmp.eq.s32.totalorder %s29, 1
    %p173 = por %p171, %p172
    %p174 = scmp.ne.s32.totalorder %s165, %s166
    %p175 = scmp.eq.s32.totalorder %s29, 0
    %p176 = por %p174, %p175
    %p177 = scmp.ne.s32.totalorder %s165, %s166
    %p178 = scmp.eq.s32.totalorder %s30, 1
    %p179 = por %p177, %p178
    %p181 = scmp.ne.s32.totalorder %s166, %s180
    %p182 = scmp.eq.s32.totalorder %s30, 0
    %p183 = por %p181, %p182
    %s185 = sadd.s32 %s184, 1
    %p188 = scmp.eq.s32.totalorder %s24, 1
    %p189 = scmp.ne.s32.totalorder %s184, %s186
    %p190 = scmp.eq.s32.totalorder %s24, 0
    %p191 = por %p189, %p190
    %p192 = scmp.ne.s32.totalorder %s184, %s186
    %p193 = scmp.eq.s32.totalorder %s29, 1
    %p194 = por %p192, %p193
    %p195 = scmp.ne.s32.totalorder %s186, %s187
    %p196 = scmp.eq.s32.totalorder %s29, 0
    %p197 = por %p195, %p196
    %p198 = scmp.ne.s32.totalorder %s186, %s187
    %p199 = scmp.eq.s32.totalorder %s30, 1
    %p200 = por %p198, %p199
    %p202 = scmp.ne.s32.totalorder %s187, %s201
    %p203 = scmp.eq.s32.totalorder %s30, 0
    %p204 = por %p202, %p203
    %s206 = sadd.s32 %s205, 1
    %p209 = scmp.eq.s32.totalorder %s24, 1
    %p210 = scmp.ne.s32.totalorder %s205, %s207
    %p211 = scmp.eq.s32.totalorder %s24, 0
    %p212 = por %p210, %p211
    %p213 = scmp.ne.s32.totalorder %s205, %s207
    %p214 = scmp.eq.s32.totalorder %s29, 1
    %p215 = por %p213, %p214
    %p216 = scmp.ne.s32.totalorder %s207, %s208
    %p217 = scmp.eq.s32.totalorder %s29, 0
    %p218 = por %p216, %p217
    %p219 = scmp.ne.s32.totalorder %s207, %s208
    %p220 = scmp.eq.s32.totalorder %s30, 1
    %p221 = por %p219, %p220
    %p223 = scmp.ne.s32.totalorder %s208, %s222
    %p224 = scmp.eq.s32.totalorder %s30, 0
    %p225 = por %p223, %p224
    %s227 = sadd.s32 %s226, 1
    %p230 = scmp.eq.s32.totalorder %s24, 1
    %p231 = scmp.ne.s32.totalorder %s226, %s228
    %p232 = scmp.eq.s32.totalorder %s24, 0
    %p233 = por %p231, %p232
    %p234 = scmp.ne.s32.totalorder %s226, %s228
    %p235 = scmp.eq.s32.totalorder %s29, 1
    %p236 = por %p234, %p235
    %p237 = scmp.ne.s32.totalorder %s228, %s229
    %p238 = scmp.eq.s32.totalorder %s29, 0
    %p239 = por %p237, %p238
    %p240 = scmp.ne.s32.totalorder %s228, %s229
    %p241 = scmp.eq.s32.totalorder %s30, 1
    %p242 = por %p240, %p241
    %p244 = scmp.ne.s32.totalorder %s229, %s243
    %p245 = scmp.eq.s32.totalorder %s30, 0
    %p246 = por %p244, %p245
    %s248 = sadd.s32 %s247, 1
    %p251 = scmp.eq.s32.totalorder %s24, 1
    %p252 = scmp.ne.s32.totalorder %s247, %s249
    %p253 = scmp.eq.s32.totalorder %s24, 0
    %p254 = por %p252, %p253
    %p255 = scmp.ne.s32.totalorder %s247, %s249
    %p256 = scmp.eq.s32.totalorder %s29, 1
    %p257 = por %p255, %p256
    %p258 = scmp.ne.s32.totalorder %s249, %s250
    %p259 = scmp.eq.s32.totalorder %s29, 0
    %p260 = por %p258, %p259
    %p261 = scmp.ne.s32.totalorder %s249, %s250
    %p262 = scmp.eq.s32.totalorder %s30, 1
    %p263 = por %p261, %p262
    %p265 = scmp.ne.s32.totalorder %s250, %s264
    %p266 = scmp.eq.s32.totalorder %s30, 0
    %p267 = por %p265, %p266
    %s269 = sadd.s32 %s268, 1
    %p272 = scmp.eq.s32.totalorder %s24, 1
    %p273 = scmp.ne.s32.totalorder %s268, %s270
    %p274 = scmp.eq.s32.totalorder %s24, 0
    %p275 = por %p273, %p274
    %p276 = scmp.ne.s32.totalorder %s268, %s270
    %p277 = scmp.eq.s32.totalorder %s29, 1
    %p278 = por %p276, %p277
    %p279 = scmp.ne.s32.totalorder %s270, %s271
    %p280 = scmp.eq.s32.totalorder %s29, 0
    %p281 = por %p279, %p280
    %p282 = scmp.ne.s32.totalorder %s270, %s271
    %p283 = scmp.eq.s32.totalorder %s30, 1
    %p284 = por %p282, %p283
    %p286 = scmp.ne.s32.totalorder %s271, %s285
    %p287 = scmp.eq.s32.totalorder %s30, 0
    %p288 = por %p286, %p287
    %s290 = sadd.s32 %s289, 1
    %p293 = scmp.eq.s32.totalorder %s24, 1
    %p294 = scmp.ne.s32.totalorder %s289, %s291
    %p295 = scmp.eq.s32.totalorder %s24, 0
    %p296 = por %p294, %p295
    %p297 = scmp.ne.s32.totalorder %s289, %s291
    %p298 = scmp.eq.s32.totalorder %s29, 1
    %p299 = por %p297, %p298
    %p300 = scmp.ne.s32.totalorder %s291, %s292
    %p301 = scmp.eq.s32.totalorder %s29, 0
    %p302 = por %p300, %p301
    %p303 = scmp.ne.s32.totalorder %s291, %s292
    %p304 = scmp.eq.s32.totalorder %s30, 1
    %p305 = por %p303, %p304
    %p307 = scmp.ne.s32.totalorder %s292, %s306
    %p308 = scmp.eq.s32.totalorder %s30, 0
    %p309 = por %p307, %p308
    %s311 = sadd.s32 %s310, 1
    %p314 = scmp.eq.s32.totalorder %s24, 1
    %p315 = scmp.ne.s32.totalorder %s310, %s312
    %p316 = scmp.eq.s32.totalorder %s24, 0
    %p317 = por %p315, %p316
    %p318 = scmp.ne.s32.totalorder %s310, %s312
    %p319 = scmp.eq.s32.totalorder %s29, 1
    %p320 = por %p318, %p319
    %p321 = scmp.ne.s32.totalorder %s312, %s313
    %p322 = scmp.eq.s32.totalorder %s29, 0
    %p323 = por %p321, %p322
    %p324 = scmp.ne.s32.totalorder %s312, %s313
    %p325 = scmp.eq.s32.totalorder %s30, 1
    %p326 = por %p324, %p325
    %p328 = scmp.ne.s32.totalorder %s313, %s327
    %p329 = scmp.eq.s32.totalorder %s30, 0
    %p330 = por %p328, %p329
    %s332 = sadd.s32 %s331, 1
    %p335 = scmp.eq.s32.totalorder %s24, 1
    %p336 = scmp.ne.s32.totalorder %s331, %s333
    %p337 = scmp.eq.s32.totalorder %s24, 0
    %p338 = por %p336, %p337
    %p339 = scmp.ne.s32.totalorder %s331, %s333
    %p340 = scmp.eq.s32.totalorder %s29, 1
    %p341 = por %p339, %p340
    %p342 = scmp.ne.s32.totalorder %s333, %s334
    %p343 = scmp.eq.s32.totalorder %s29, 0
    %p344 = por %p342, %p343
    %p345 = scmp.ne.s32.totalorder %s333, %s334
    %p346 = scmp.eq.s32.totalorder %s30, 1
    %p347 = por %p345, %p346
    %p349 = scmp.ne.s32.totalorder %s334, %s348
    %p350 = scmp.eq.s32.totalorder %s30, 0
    %p351 = por %p349, %p350
    %s353 = sadd.s32 %s352, 1
    %p356 = scmp.eq.s32.totalorder %s24, 1
    %p357 = scmp.ne.s32.totalorder %s352, %s354
    %p358 = scmp.eq.s32.totalorder %s24, 0
    %p359 = por %p357, %p358
    %p360 = scmp.ne.s32.totalorder %s352, %s354
    %p361 = scmp.eq.s32.totalorder %s29, 1
    %p362 = por %p360, %p361
    %p363 = scmp.ne.s32.totalorder %s354, %s355
    %p364 = scmp.eq.s32.totalorder %s29, 0
    %p365 = por %p363, %p364
    %p366 = scmp.ne.s32.totalorder %s354, %s355
    %p367 = scmp.eq.s32.totalorder %s30, 1
    %p368 = por %p366, %p367
    %p370 = scmp.ne.s32.totalorder %s355, %s369
    %p371 = scmp.eq.s32.totalorder %s30, 0
    %p372 = por %p370, %p371
    %s373 = ssub.s32 %s24, %s31
    %p374 = scmp.eq.s32.totalorder %s373, 0
    %s376 = sadd.s32 %s375, 1
    %s377 = scalar_select %p374, %s375, %s376
    %p380 = pneg %p374
    %p381 = scmp.eq.s32.totalorder %s24, 1
    %p382 = por %p380, %p381
    %p383 = scmp.ne.s32.totalorder %s375, %s378
    %p384 = scmp.eq.s32.totalorder %s24, 0
    %p385 = por %p383, %p384
    %p386 = scmp.ne.s32.totalorder %s375, %s378
    %p387 = scmp.eq.s32.totalorder %s29, 1
    %p388 = por %p386, %p387
    %p389 = scmp.ne.s32.totalorder %s378, %s379
    %p390 = scmp.eq.s32.totalorder %s29, 0
    %p391 = por %p389, %p390
    %p392 = scmp.ne.s32.totalorder %s378, %s379
    %p393 = scmp.eq.s32.totalorder %s30, 1
    %p394 = por %p392, %p393
    %p396 = scmp.ne.s32.totalorder %s379, %s395
    %p397 = scmp.eq.s32.totalorder %s30, 0
    %p398 = por %p396, %p397
    %s399 = ssub.s32 %s24, %s31
    %p400 = scmp.eq.s32.totalorder %s399, 0
    %s402 = sadd.s32 %s401, 1
    %s403 = scalar_select %p400, %s401, %s402
    %p406 = pneg %p400
    %p407 = scmp.eq.s32.totalorder %s24, 1
    %p408 = por %p406, %p407
    %p409 = scmp.ne.s32.totalorder %s401, %s404
    %p410 = scmp.eq.s32.totalorder %s24, 0
    %p411 = por %p409, %p410
    %p412 = scmp.ne.s32.totalorder %s401, %s404
    %p413 = scmp.eq.s32.totalorder %s29, 1
    %p414 = por %p412, %p413
    %p415 = scmp.ne.s32.totalorder %s404, %s405
    %p416 = scmp.eq.s32.totalorder %s29, 0
    %p417 = por %p415, %p416
    %p418 = scmp.ne.s32.totalorder %s404, %s405
    %p419 = scmp.eq.s32.totalorder %s30, 1
    %p420 = por %p418, %p419
    %p422 = scmp.ne.s32.totalorder %s405, %s421
    %p423 = scmp.eq.s32.totalorder %s30, 0
    %p424 = por %p422, %p423
    %p425 = scmp.le.s32.totalorder 1, %s24
    %p426 = scmp.lt.s32.totalorder %s24, 3
    %p427 = pnand %p425, %p426
    %p428 = pneg %p427
    // Predicated region
    $region9: #{flow_step_forward.1} parent=5 // pred_check
      _
    $region10: #{flow_step_forward.1} parent=5 // pred_check_branch
      %430 = sbr.rel (%p427) target = $region12
    $region11: #{flow_step_forward.1} parent=5 // pred_region
      %s431 = ssub.s32 %s24, 1
      // Predicated region
      $region13: #{flow_step_forward.1} parent=11 // pred_check
        %p432 = pneg %p71
      $region14: #{flow_step_forward.1} parent=11 // pred_check_branch
        %434 = sbr.rel (%p432) target = $region16
      $region15: #{flow_step_forward.1} parent=11 // pred_region
        _
      $region16: #{flow_step_forward.1} parent=11 // pred_fallthru
        _
      // Predicated region
      $region17: #{flow_step_forward.1} parent=11 // pred_check
        %p435 = pneg %p92
      $region18: #{flow_step_forward.1} parent=11 // pred_check_branch
        %437 = sbr.rel (%p435) target = $region20
      $region19: #{flow_step_forward.1} parent=11 // pred_region
        _
      $region20: #{flow_step_forward.1} parent=11 // pred_fallthru
        _
      // Predicated region
      $region21: #{flow_step_forward.1} parent=11 // pred_check
        %p438 = pneg %p113
      $region22: #{flow_step_forward.1} parent=11 // pred_check_branch
        %440 = sbr.rel (%p438) target = $region24
      $region23: #{flow_step_forward.1} parent=11 // pred_region
        _
      $region24: #{flow_step_forward.1} parent=11 // pred_fallthru
        _
      // Predicated region
      $region25: #{flow_step_forward.1} parent=11 // pred_check
        %p441 = pneg %p134
      $region26: #{flow_step_forward.1} parent=11 // pred_check_branch
        %443 = sbr.rel (%p441) target = $region28
      $region27: #{flow_step_forward.1} parent=11 // pred_region
        _
      $region28: #{flow_step_forward.1} parent=11 // pred_fallthru
        _
      // Predicated region
      $region29: #{flow_step_forward.1} parent=11 // pred_check
        %p444 = pneg %p155
      $region30: #{flow_step_forward.1} parent=11 // pred_check_branch
        %446 = sbr.rel (%p444) target = $region32
      $region31: #{flow_step_forward.1} parent=11 // pred_region
        _
      $region32: #{flow_step_forward.1} parent=11 // pred_fallthru
        _
      // Predicated region
      $region33: #{flow_step_forward.1} parent=11 // pred_check
        %p447 = pneg %p176
      $region34: #{flow_step_forward.1} parent=11 // pred_check_branch
        %449 = sbr.rel (%p447) target = $region36
      $region35: #{flow_step_forward.1} parent=11 // pred_region
        _
      $region36: #{flow_step_forward.1} parent=11 // pred_fallthru
        _
      // Predicated region
      $region37: #{flow_step_forward.1} parent=11 // pred_check
        %p450 = pneg %p197
      $region38: #{flow_step_forward.1} parent=11 // pred_check_branch
        %452 = sbr.rel (%p450) target = $region40
      $region39: #{flow_step_forward.1} parent=11 // pred_region
        _
      $region40: #{flow_step_forward.1} parent=11 // pred_fallthru
        _
      // Predicated region
      $region41: #{flow_step_forward.1} parent=11 // pred_check
        %p453 = pneg %p218
      $region42: #{flow_step_forward.1} parent=11 // pred_check_branch
        %455 = sbr.rel (%p453) target = $region44
      $region43: #{flow_step_forward.1} parent=11 // pred_region
        _
      $region44: #{flow_step_forward.1} parent=11 // pred_fallthru
        _
      // Predicated region
      $region45: #{flow_step_forward.1} parent=11 // pred_check
        %p456 = pneg %p239
      $region46: #{flow_step_forward.1} parent=11 // pred_check_branch
        %458 = sbr.rel (%p456) target = $region48
      $region47: #{flow_step_forward.1} parent=11 // pred_region
        _
      $region48: #{flow_step_forward.1} parent=11 // pred_fallthru
        _
      // Predicated region
      $region49: #{flow_step_forward.1} parent=11 // pred_check
        %p459 = pneg %p260
      $region50: #{flow_step_forward.1} parent=11 // pred_check_branch
        %461 = sbr.rel (%p459) target = $region52
      $region51: #{flow_step_forward.1} parent=11 // pred_region
        _
      $region52: #{flow_step_forward.1} parent=11 // pred_fallthru
        _
      // Predicated region
      $region53: #{flow_step_forward.1} parent=11 // pred_check
        %p462 = pneg %p281
      $region54: #{flow_step_forward.1} parent=11 // pred_check_branch
        %464 = sbr.rel (%p462) target = $region56
      $region55: #{flow_step_forward.1} parent=11 // pred_region
        _
      $region56: #{flow_step_forward.1} parent=11 // pred_fallthru
        _
      // Predicated region
      $region57: #{flow_step_forward.1} parent=11 // pred_check
        %p465 = pneg %p302
      $region58: #{flow_step_forward.1} parent=11 // pred_check_branch
        %467 = sbr.rel (%p465) target = $region60
      $region59: #{flow_step_forward.1} parent=11 // pred_region
        _
      $region60: #{flow_step_forward.1} parent=11 // pred_fallthru
        _
      // Predicated region
      $region61: #{flow_step_forward.1} parent=11 // pred_check
        %p468 = pneg %p323
      $region62: #{flow_step_forward.1} parent=11 // pred_check_branch
        %470 = sbr.rel (%p468) target = $region64
      $region63: #{flow_step_forward.1} parent=11 // pred_region
        _
      $region64: #{flow_step_forward.1} parent=11 // pred_fallthru
        _
      // Predicated region
      $region65: #{flow_step_forward.1} parent=11 // pred_check
        %p471 = pneg %p344
      $region66: #{flow_step_forward.1} parent=11 // pred_check_branch
        %473 = sbr.rel (%p471) target = $region68
      $region67: #{flow_step_forward.1} parent=11 // pred_region
        _
      $region68: #{flow_step_forward.1} parent=11 // pred_fallthru
        _
      // Predicated region
      $region69: #{flow_step_forward.1} parent=11 // pred_check
        %p474 = pneg %p365
      $region70: #{flow_step_forward.1} parent=11 // pred_check_branch
        %476 = sbr.rel (%p474) target = $region72
      $region71: #{flow_step_forward.1} parent=11 // pred_region
        _
      $region72: #{flow_step_forward.1} parent=11 // pred_fallthru
        _
    $region12: #{flow_step_forward.1} parent=5 // pred_fallthru
      _
    %p477 = scmp.lt.s32.totalorder %s24, 2
    // Predicated region
    $region73: #{flow_step_forward.1} parent=5 // pred_check
      %p478 = pneg %p477
    $region74: #{flow_step_forward.1} parent=5 // pred_check_branch
      %480 = sbr.rel (%p478) target = $region76
    $region75: #{flow_step_forward.1} parent=5 // pred_region
      // Predicated region
      $region77: #{flow_step_forward.1} parent=75 // pred_check
        %p481 = pneg %p44
      $region78: #{flow_step_forward.1} parent=75 // pred_check_branch
        %483 = sbr.rel (%p481) target = $region80
      $region79: #{flow_step_forward.1} parent=75 // pred_region
        %s484 = smul.u32 2, %s24
        %p485 = scmp.lt.s32.totalorder %s484, 3
        %s486 = scalar_select %p485, %s484, 3
        %s487 = smul.addr %s486, 4
        %s488 = scalar_lea.vmem %s0, %s487
        %s489 = smul.u32 2, %s24
      $region80: #{flow_step_forward.1} parent=75 // pred_fallthru
        _
    $region76: #{flow_step_forward.1} parent=5 // pred_fallthru
      _
    %p490 = scmp.le.s32.totalorder 1, %s24
    %p491 = scmp.lt.s32.totalorder %s24, 3
    %p492 = pnand %p490, %p491
    %p493 = pneg %p492
    // Predicated region
    $region81: #{flow_step_forward.1} parent=5 // pred_check
      _
    $region82: #{flow_step_forward.1} parent=5 // pred_check_branch
      %495 = sbr.rel (%p492) target = $region84
    $region83: #{flow_step_forward.1} parent=5 // pred_region
      %s496 = ssub.s32 %s24, 1
      %s497 = smul.u32 2, %s29
      %p498 = scmp.lt.s32.totalorder %s497, 3
      %s499 = scalar_select %p498, %s497, 3
      %s500 = smul.addr %s499, 4
      %s501 = scalar_lea.vmem %s0, %s500
      %p502 = pneg %p50
      %p503 = pneg %p47
      %p504 = pneg %p71
      %p505 = pneg %p68
      %p506 = pneg %p92
      %p507 = pneg %p89
      %p508 = pneg %p113
      %p509 = pneg %p110
      %p510 = pneg %p134
      %p511 = pneg %p131
      %p512 = pneg %p155
      %p513 = pneg %p152
      %p514 = pneg %p176
      %p515 = pneg %p173
      %p516 = pneg %p197
      %p517 = pneg %p194
      %p518 = pneg %p218
      %p519 = pneg %p215
      %p520 = pneg %p239
      %p521 = pneg %p236
      %p522 = pneg %p260
      %p523 = pneg %p257
      %p524 = pneg %p281
      %p525 = pneg %p278
      %p526 = pneg %p302
      %p527 = pneg %p299
      %p528 = pneg %p323
      %p529 = pneg %p320
      %p530 = pneg %p344
      %p531 = pneg %p341
      %p532 = pneg %p365
      %p533 = pneg %p362
      %p534 = pneg %p391
      %p535 = pneg %p388
      %s536 = smul.u32 2, %s29
      %p537 = scmp.lt.s32.totalorder %s536, 3
      %s538 = scalar_select %p537, %s536, 3
      %s539 = smul.addr %s538, 4
      %s540 = scalar_lea.vmem %s16, %s539
      %p541 = pneg %p417
      %p542 = pneg %p414
      %p543 = scmp.lt.s32.totalorder %s29, 1
      %s544 = scalar_select %p543, %s29, 1
      %s545 = scalar_lea.vmem %s17, %s544
      %s546 = smul.u32 2, %s29
      %p547 = scmp.lt.s32.totalorder %s546, 3
      %s548 = scalar_select %p547, %s546, 3
      %s549 = smul.addr %s548, 4
      %s550 = scalar_lea.vmem %s0, %s549
      %s551 = smul.u32 2, %s29
      %s552 = smul.u32 2, %s29
      %p553 = scmp.lt.s32.totalorder %s552, 3
      %s554 = scalar_select %p553, %s552, 3
      %s555 = smul.addr %s554, 4
      %s556 = scalar_lea.vmem %s16, %s555
      %s557 = smul.u32 2, %s29
      %p558 = scmp.lt.s32.totalorder %s29, 1
      %s559 = scalar_select %p558, %s29, 1
      %s560 = scalar_lea.vmem %s17, %s559
      %v562 = vld [vmem:[%s550] sm:$0xff]
      %v563 = vld [vmem:[%s1] sm:$0xf]
      %v564 = vld [vmem:[%s2] sm:$0xf]
      %566 = vset.pattern.permute.xlu0 0
      %567 = vperm.xlu0 %566, %v564
      %v568 = vpop.permute.xlu0 %567
      %571 = vst [vmem:[#allocation1] ss:$2 sm:$0xff] %v562
      %v572 = vld.sshfl [vmem:[#allocation1] sm:$0xff pattern:$0x75316420]
      %v573 = vld.sshfl [vmem:[#allocation1 + $0x8] sm:$0xff pattern:$0x75316420]
      %vm574 = vcmask 31744
      %v576 = vsel %vm574, %v563, 0
      %vm578 = vcmask 1043456
      %v579 = vsel %vm578, %v572, 0
      %v581 = vsel %vm578, %v573, 0
      %583 = vmatpush.msra.mxu0 0.0
      %584 = vmatpush.msra.mxu0 0.0
      %585 = vmatpush.msra.mxu0 0.0
      %586 = vmatpush.msra.mxu0 0.0
      %587 = vmatpush.msra.mxu0 0.0
      %588 = vmatpush.msra.mxu0 0.0
      %589 = vmatpush.msra.mxu0 0.0
      %590 = vmatpush.msra.mxu0 0.0
      %591 = vmatpush.msra.mxu0 0.0
      %592 = vmatpush.msra.mxu0 0.0
      %593 = vmatpush.msra.mxu0 0.0
      %594 = vmatpush.msra.mxu0 0.0
      %595 = vmatpush.msra.mxu0 0.0
      %596 = vmatpush.msra.mxu0 0.0
      %597 = vmatpush.msra.mxu0 0.0
      %598 = vmatpush.msra.mxu0 %v579
      %599 = vmatmul.f32.gmra.mxu0 %v576
      %v600 = vpop.f32.mrf.mxu0
      %v601 = vadd.f32 %v568, %v600
      %602 = vdwg.mxu0
      %603 = vmatpush.msra.mxu0 0.0
      %604 = vmatpush.msra.mxu0 0.0
      %605 = vmatpush.msra.mxu0 0.0
      %606 = vmatpush.msra.mxu0 0.0
      %607 = vmatpush.msra.mxu0 0.0
      %608 = vmatpush.msra.mxu0 0.0
      %609 = vmatpush.msra.mxu0 0.0
      %610 = vmatpush.msra.mxu0 0.0
      %611 = vmatpush.msra.mxu0 0.0
      %612 = vmatpush.msra.mxu0 0.0
      %613 = vmatpush.msra.mxu0 0.0
      %614 = vmatpush.msra.mxu0 0.0
      %615 = vmatpush.msra.mxu0 0.0
      %616 = vmatpush.msra.mxu0 0.0
      %617 = vmatpush.msra.mxu0 0.0
      %618 = vmatpush.msra.mxu0 %v581
      %619 = vmatmul.f32.gmra.mxu0 %v576
      %v620 = vpop.f32.mrf.mxu0
      %v621 = vadd.f32 %v568, %v620
      %622 = vdwg.mxu0
      %v623 = vld [vmem:[%s5] sm:$0x3]
      %625 = vset.pattern.permute.xlu0 0
      %626 = vperm.xlu0 %625, %v623
      %v627 = vpop.permute.xlu0 %626
      %v628 = vrot.slane %v627, 6
      %v630 = vmul.f32 %v601, %v628
      %v631 = vmul.f32 %v621, %v628
      %v632 = vld [vmem:[%s6] sm:$0x3]
      %634 = vset.pattern.permute.xlu0 0
      %635 = vperm.xlu0 %634, %v632
      %v636 = vpop.permute.xlu0 %635
      %v637 = vrot.slane %v636, 6
      %v639 = vadd.f32 %v630, %v637
      %v640 = vadd.f32 %v631, %v637
      %v641 = vmax.f32 %v639, 0.0
      %v642 = vmax.f32 %v640, 0.0
      %v645 = vrot.slane %v641, 2
      %v646 = vrot.slane %v642, 2
      %649 = vrot.lane.b32.xlu0 %v645, 17
      %v650 = vpop.permute.xlu0 %649
      %651 = vrot.lane.b32.xlu0 %v646, 17
      %v652 = vpop.permute.xlu0 %651
      %v653 = vlaneseq
      %v654 = vand.u32 %v653, 127
      %vm655 = vcmp.lt.s32.totalorder %v654, 17
      %v656 = vsel %vm655, %v650, %v652
      %v657 = vsel %vm655, %v652, %v650
      %v658 = vld [vmem:[%s3] ss:$8 sm:$0x3]
      %v660 = vperm.slane %v658, 0
      %v661 = vperm.slane %v658, 1
      %v664 = vmul.f32 %v657, %v660
      %v665 = vmul.f32 %v656, %v661
      %666 = vrot.lane.b32.xlu0 %v645, 16
      %v667 = vpop.permute.xlu0 %666
      %668 = vrot.lane.b32.xlu0 %v646, 16
      %v669 = vpop.permute.xlu0 %668
      %vm670 = vcmp.lt.s32.totalorder %v654, 16
      %v671 = vsel %vm670, %v667, %v669
      %v672 = vsel %vm670, %v669, %v667
      %s673 = scalar_lea.vmem %s3, 1
      %v674 = vld [vmem:[%s673] ss:$8 sm:$0x3]
      %v676 = vperm.slane %v674, 0
      %v677 = vperm.slane %v674, 1
      %v680 = vmul.f32 %v672, %v676
      %v681 = vmul.f32 %v671, %v677
      %682 = vrot.lane.b32.xlu0 %v645, 15
      %v683 = vpop.permute.xlu0 %682
      %684 = vrot.lane.b32.xlu0 %v646, 15
      %v685 = vpop.permute.xlu0 %684
      %vm686 = vcmp.lt.s32.totalorder %v654, 15
      %v687 = vsel %vm686, %v683, %v685
      %v688 = vsel %vm686, %v685, %v683
      %s689 = scalar_lea.vmem %s3, 2
      %v690 = vld [vmem:[%s689] ss:$8 sm:$0x3]
      %v692 = vperm.slane %v690, 0
      %v693 = vperm.slane %v690, 1
      %v696 = vmul.f32 %v688, %v692
      %v697 = vmul.f32 %v687, %v693
      %698 = vrot.lane.b32.xlu0 %v645, 1
      %v699 = vpop.permute.xlu0 %698
      %700 = vrot.lane.b32.xlu0 %v646, 1
      %v701 = vpop.permute.xlu0 %700
      %vm702 = vcmp.lt.s32.totalorder %v654, 1
      %v703 = vsel %vm702, %v699, %v701
      %v704 = vsel %vm702, %v701, %v699
      %s705 = scalar_lea.vmem %s3, 3
      %v706 = vld [vmem:[%s705] ss:$8 sm:$0x3]
      %v708 = vperm.slane %v706, 0
      %v709 = vperm.slane %v706, 1
      %v712 = vmul.f32 %v704, %v708
      %v713 = vmul.f32 %v703, %v709
      %714 = vrot.lane.b32.xlu0 %v645, 127
      %v715 = vpop.permute.xlu0 %714
      %716 = vrot.lane.b32.xlu0 %v646, 127
      %v717 = vpop.permute.xlu0 %716
      %vm718 = vcmp.lt.s32.totalorder %v654, 127
      %v719 = vsel %vm718, %v715, %v717
      %v720 = vsel %vm718, %v717, %v715
      %s721 = scalar_lea.vmem %s3, 5
      %v722 = vld [vmem:[%s721] ss:$8 sm:$0x3]
      %v724 = vperm.slane %v722, 0
      %v725 = vperm.slane %v722, 1
      %v728 = vmul.f32 %v719, %v724
      %v729 = vmul.f32 %v720, %v725
      %730 = vrot.lane.b32.xlu0 %v645, 113
      %v731 = vpop.permute.xlu0 %730
      %732 = vrot.lane.b32.xlu0 %v646, 113
      %v733 = vpop.permute.xlu0 %732
      %vm734 = vcmp.lt.s32.totalorder %v654, 113
      %v735 = vsel %vm734, %v731, %v733
      %v736 = vsel %vm734, %v733, %v731
      %s737 = scalar_lea.vmem %s3, 6
      %v738 = vld [vmem:[%s737] ss:$8 sm:$0x3]
      %v740 = vperm.slane %v738, 0
      %v741 = vperm.slane %v738, 1
      %v744 = vmul.f32 %v735, %v740
      %v745 = vmul.f32 %v736, %v741
      %746 = vrot.lane.b32.xlu0 %v645, 112
      %v747 = vpop.permute.xlu0 %746
      %748 = vrot.lane.b32.xlu0 %v646, 112
      %v749 = vpop.permute.xlu0 %748
      %vm750 = vcmp.lt.s32.totalorder %v654, 112
      %v751 = vsel %vm750, %v747, %v749
      %v752 = vsel %vm750, %v749, %v747
      %s753 = scalar_lea.vmem %s3, 7
      %v754 = vld [vmem:[%s753] ss:$8 sm:$0x3]
      %v756 = vperm.slane %v754, 0
      %v757 = vperm.slane %v754, 1
      %v760 = vmul.f32 %v751, %v756
      %v761 = vmul.f32 %v752, %v757
      %762 = vrot.lane.b32.xlu0 %v645, 111
      %v763 = vpop.permute.xlu0 %762
      %764 = vrot.lane.b32.xlu0 %v646, 111
      %v765 = vpop.permute.xlu0 %764
      %vm766 = vcmp.lt.s32.totalorder %v654, 111
      %v767 = vsel %vm766, %v763, %v765
      %v768 = vsel %vm766, %v765, %v763
      %s769 = scalar_lea.vmem %s3, 16
      %v770 = vld [vmem:[%s769] ss:$8 sm:$0x3]
      %v772 = vperm.slane %v770, 0
      %v773 = vperm.slane %v770, 1
      %v776 = vmul.f32 %v767, %v772
      %v777 = vmul.f32 %v768, %v773
      %v780 = vrot.slane %v680, 6
      %v781 = vrot.slane %v681, 6
      %v786 = vrot.slane %v696, 4
      %v787 = vrot.slane %v697, 4
      %v792 = vrot.slane %v712, 2
      %v793 = vrot.slane %v713, 2
      %v798 = vrot.slane %v728, 6
      %v799 = vrot.slane %v729, 6
      %v804 = vrot.slane %v744, 4
      %v805 = vrot.slane %v745, 4
      %v810 = vrot.slane %v760, 2
      %v811 = vrot.slane %v761, 2
      %vm814 = vcmask 1041408
      %v815 = vsel %vm814, %v664, %v780
      %v816 = vsel %vm814, %v665, %v781
      %v817 = vsel %vm578, %v815, %v786
      %v818 = vsel %vm578, %v816, %v787
      %vm819 = vcmask 1045504
      %v820 = vsel %vm819, %v817, %v792
      %v821 = vsel %vm819, %v818, %v793
      %v822 = vsel %vm814, %v645, %v798
      %v823 = vsel %vm814, %v646, %v799
      %v824 = vsel %vm578, %v822, %v804
      %v825 = vsel %vm578, %v823, %v805
      %v826 = vsel %vm819, %v824, %v810
      %v827 = vsel %vm819, %v825, %v811
      %v828 = vld [vmem:[%s7] sm:$0xf]
      %v829 = vld [vmem:[%s7 + $0x4] sm:$0xf]
      %v830 = vld [vmem:[%s7 + $0x8] sm:$0xf]
      %v831 = vld [vmem:[%s7 + $0xc] sm:$0xf]
      %v832 = vpack.c.bf16 %v826, %v820
      %v833 = vpack.c.bf16 %v827, %v821
      %v834 = vpack.c.bf16 %v776, %v776
      %v835 = vpack.c.bf16 %v777, %v777
      %v840 = vunpack.c.l.b16 %v828
      %v841 = vunpack.c.l.b16 %v829
      %v842 = vunpack.c.l.b16 %v830
      %v843 = vunpack.c.l.b16 %v831
      %v844 = vpack.c.b16 %v841, %v840
      %v845 = vpack.c.b16 %v843, %v842
      %vm846 = vcmask 146432
      %v848 = vsel %vm846, %v844, 0
      %v851 = vsel %vm846, %v845, 0
      %vm853 = vcmask 1040384
      %v855 = vsel %vm853, %v834, 0
      %v858 = vsel %vm853, %v835, 0
      %860 = vmatpush.bf16.msra.mxu0 0
      %861 = vmatpush.bf16.msra.mxu0 0
      %862 = vmatpush.bf16.msra.mxu0 0
      %863 = vmatpush.bf16.msra.mxu0 0
      %864 = vmatpush.bf16.msra.mxu0 0
      %865 = vmatpush.bf16.msra.mxu0 0
      %866 = vmatpush.bf16.msra.mxu0 %v855
      %867 = vmatpush.bf16.msra.mxu0 %v832
      %868 = vmatmul.bf16.gmra.mxu0 %v848
      %v869 = vpop.f32.mrf.mxu0
      %v870 = vadd.f32 0.0, %v869
      %v871 = vpop.f32.mrf.mxu0
      %v872 = vadd.f32 0.0, %v871
      %873 = vmatmul.bf16.gmra.mxu0 %v851
      %v874 = vpop.f32.mrf.mxu0
      %v875 = vadd.f32 0.0, %v874
      %v876 = vpop.f32.mrf.mxu0
      %v877 = vadd.f32 0.0, %v876
      %878 = vdwg.mxu0
      %879 = vmatpush.bf16.msra.mxu0 0
      %880 = vmatpush.bf16.msra.mxu0 0
      %881 = vmatpush.bf16.msra.mxu0 0
      %882 = vmatpush.bf16.msra.mxu0 0
      %883 = vmatpush.bf16.msra.mxu0 0
      %884 = vmatpush.bf16.msra.mxu0 0
      %885 = vmatpush.bf16.msra.mxu0 %v858
      %886 = vmatpush.bf16.msra.mxu0 %v833
      %887 = vmatmul.bf16.gmra.mxu0 %v848
      %v888 = vpop.f32.mrf.mxu0
      %v889 = vadd.f32 0.0, %v888
      %v890 = vpop.f32.mrf.mxu0
      %v891 = vadd.f32 0.0, %v890
      %892 = vmatmul.bf16.gmra.mxu0 %v851
      %v893 = vpop.f32.mrf.mxu0
      %v894 = vadd.f32 0.0, %v893
      %v895 = vpop.f32.mrf.mxu0
      %v896 = vadd.f32 0.0, %v895
      %897 = vdwg.mxu0
      %v898 = vld [vmem:[%s8] sm:$0xff]
      %v899 = vld [vmem:[%s8 + $0x8] sm:$0xff]
      %v900 = vld [vmem:[%s8 + $0x10] sm:$0xff]
      %v901 = vld [vmem:[%s8 + $0x18] sm:$0xff]
      %903 = vset.pattern.permute.xlu0 0
      %904 = vperm.xlu0 %903, %v898
      %v905 = vpop.permute.xlu0 %904
      %908 = vset.pattern.permute.xlu0 0
      %909 = vperm.xlu0 %908, %v899
      %v910 = vpop.permute.xlu0 %909
      %913 = vset.pattern.permute.xlu0 0
      %914 = vperm.xlu0 %913, %v900
      %v915 = vpop.permute.xlu0 %914
      %918 = vset.pattern.permute.xlu0 0
      %919 = vperm.xlu0 %918, %v901
      %v920 = vpop.permute.xlu0 %919
      %v922 = vmul.f32 %v870, %v905
      %v923 = vmul.f32 %v889, %v905
      %v924 = vmul.f32 %v872, %v910
      %v925 = vmul.f32 %v891, %v910
      %v926 = vmul.f32 %v875, %v915
      %v927 = vmul.f32 %v894, %v915
      %v928 = vmul.f32 %v877, %v920
      %v929 = vmul.f32 %v896, %v920
      %v930 = vld [vmem:[%s9] sm:$0xff]
      %v931 = vld [vmem:[%s9 + $0x8] sm:$0xff]
      %v932 = vld [vmem:[%s9 + $0x10] sm:$0xff]
      %v933 = vld [vmem:[%s9 + $0x18] sm:$0xff]
      %935 = vset.pattern.permute.xlu0 0
      %936 = vperm.xlu0 %935, %v930
      %v937 = vpop.permute.xlu0 %936
      %940 = vset.pattern.permute.xlu0 0
      %941 = vperm.xlu0 %940, %v931
      %v942 = vpop.permute.xlu0 %941
      %945 = vset.pattern.permute.xlu0 0
      %946 = vperm.xlu0 %945, %v932
      %v947 = vpop.permute.xlu0 %946
      %950 = vset.pattern.permute.xlu0 0
      %951 = vperm.xlu0 %950, %v933
      %v952 = vpop.permute.xlu0 %951
      %v954 = vadd.f32 %v922, %v937
      %v955 = vadd.f32 %v923, %v937
      %v956 = vadd.f32 %v924, %v942
      %v957 = vadd.f32 %v925, %v942
      %v958 = vadd.f32 %v926, %v947
      %v959 = vadd.f32 %v927, %v947
      %v960 = vadd.f32 %v928, %v952
      %v961 = vadd.f32 %v929, %v952
      %v962 = vmax.f32 %v954, 0.0
      %v963 = vmax.f32 %v955, 0.0
      %v964 = vmax.f32 %v956, 0.0
      %v965 = vmax.f32 %v957, 0.0
      %v966 = vmax.f32 %v958, 0.0
      %v967 = vmax.f32 %v959, 0.0
      %v968 = vmax.f32 %v960, 0.0
      %v969 = vmax.f32 %v961, 0.0
      %v970 = vld [vmem:[%s10] sm:$0xf]
      %v971 = vld [vmem:[%s10 + $0x4] sm:$0xf]
      %v972 = vld [vmem:[%s10 + $0x8] sm:$0xf]
      %v973 = vld [vmem:[%s10 + $0xc] sm:$0xf]
      %v974 = vpack.c.bf16 %v964, %v962
      %v975 = vpack.c.bf16 %v965, %v963
      %v976 = vpack.c.bf16 %v968, %v966
      %v977 = vpack.c.bf16 %v969, %v967
      %v982 = vunpack.c.l.b16 %v970
      %v983 = vunpack.c.l.b16 %v971
      %v984 = vunpack.c.l.b16 %v972
      %v985 = vunpack.c.l.b16 %v973
      %v986 = vpack.c.b16 %v983, %v982
      %v987 = vpack.c.b16 %v985, %v984
      %vm988 = vcmask 261120
      %v990 = vsel %vm988, %v986, 0
      %v993 = vsel %vm988, %v987, 0
      %995 = vmatpush.bf16.msra.mxu0 0
      %996 = vmatpush.bf16.msra.mxu0 0
      %997 = vmatpush.bf16.msra.mxu0 0
      %998 = vmatpush.bf16.msra.mxu0 0
      %999 = vmatpush.bf16.msra.mxu0 0
      %1000 = vmatpush.bf16.msra.mxu0 0
      %1001 = vmatpush.bf16.msra.mxu0 %v976
      %1002 = vmatpush.bf16.msra.mxu0 %v974
      %1003 = vmatmul.bf16.gmra.mxu0 %v990
      %v1004 = vpop.f32.mrf.mxu0
      %v1005 = vadd.f32 0.0, %v1004
      %v1006 = vpop.f32.mrf.mxu0
      %v1007 = vadd.f32 0.0, %v1006
      %1008 = vmatmul.bf16.gmra.mxu0 %v993
      %v1009 = vpop.f32.mrf.mxu0
      %v1010 = vadd.f32 0.0, %v1009
      %v1011 = vpop.f32.mrf.mxu0
      %v1012 = vadd.f32 0.0, %v1011
      %1013 = vdwg.mxu0
      %1014 = vmatpush.bf16.msra.mxu0 0
      %1015 = vmatpush.bf16.msra.mxu0 0
      %1016 = vmatpush.bf16.msra.mxu0 0
      %1017 = vmatpush.bf16.msra.mxu0 0
      %1018 = vmatpush.bf16.msra.mxu0 0
      %1019 = vmatpush.bf16.msra.mxu0 0
      %1020 = vmatpush.bf16.msra.mxu0 %v977
      %1021 = vmatpush.bf16.msra.mxu0 %v975
      %1022 = vmatmul.bf16.gmra.mxu0 %v990
      %v1023 = vpop.f32.mrf.mxu0
      %v1024 = vadd.f32 0.0, %v1023
      %v1025 = vpop.f32.mrf.mxu0
      %v1026 = vadd.f32 0.0, %v1025
      %1027 = vmatmul.bf16.gmra.mxu0 %v993
      %v1028 = vpop.f32.mrf.mxu0
      %v1029 = vadd.f32 0.0, %v1028
      %v1030 = vpop.f32.mrf.mxu0
      %v1031 = vadd.f32 0.0, %v1030
      %1032 = vdwg.mxu0
      %v1033 = vld [vmem:[%s11] sm:$0xff]
      %v1034 = vld [vmem:[%s11 + $0x8] sm:$0xff]
      %v1035 = vld [vmem:[%s11 + $0x10] sm:$0xff]
      %v1036 = vld [vmem:[%s11 + $0x18] sm:$0xff]
      %1038 = vset.pattern.permute.xlu0 0
      %1039 = vperm.xlu0 %1038, %v1033
      %v1040 = vpop.permute.xlu0 %1039
      %1043 = vset.pattern.permute.xlu0 0
      %1044 = vperm.xlu0 %1043, %v1034
      %v1045 = vpop.permute.xlu0 %1044
      %1048 = vset.pattern.permute.xlu0 0
      %1049 = vperm.xlu0 %1048, %v1035
      %v1050 = vpop.permute.xlu0 %1049
      %1053 = vset.pattern.permute.xlu0 0
      %1054 = vperm.xlu0 %1053, %v1036
      %v1055 = vpop.permute.xlu0 %1054
      %v1057 = vmul.f32 %v1005, %v1040
      %v1058 = vmul.f32 %v1024, %v1040
      %v1059 = vmul.f32 %v1007, %v1045
      %v1060 = vmul.f32 %v1026, %v1045
      %v1061 = vmul.f32 %v1010, %v1050
      %v1062 = vmul.f32 %v1029, %v1050
      %v1063 = vmul.f32 %v1012, %v1055
      %v1064 = vmul.f32 %v1031, %v1055
      %v1065 = vld [vmem:[%s12] sm:$0xff]
      %v1066 = vld [vmem:[%s12 + $0x8] sm:$0xff]
      %v1067 = vld [vmem:[%s12 + $0x10] sm:$0xff]
      %v1068 = vld [vmem:[%s12 + $0x18] sm:$0xff]
      %1070 = vset.pattern.permute.xlu0 0
      %1071 = vperm.xlu0 %1070, %v1065
      %v1072 = vpop.permute.xlu0 %1071
      %1075 = vset.pattern.permute.xlu0 0
      %1076 = vperm.xlu0 %1075, %v1066
      %v1077 = vpop.permute.xlu0 %1076
      %1080 = vset.pattern.permute.xlu0 0
      %1081 = vperm.xlu0 %1080, %v1067
      %v1082 = vpop.permute.xlu0 %1081
      %1085 = vset.pattern.permute.xlu0 0
      %1086 = vperm.xlu0 %1085, %v1068
      %v1087 = vpop.permute.xlu0 %1086
      %v1089 = vadd.f32 %v1057, %v1072
      %v1090 = vadd.f32 %v1058, %v1072
      %v1091 = vadd.f32 %v1059, %v1077
      %v1092 = vadd.f32 %v1060, %v1077
      %v1093 = vadd.f32 %v1061, %v1082
      %v1094 = vadd.f32 %v1062, %v1082
      %v1095 = vadd.f32 %v1063, %v1087
      %v1096 = vadd.f32 %v1064, %v1087
      %v1097 = vmax.f32 %v1089, 0.0
      %v1098 = vmax.f32 %v1090, 0.0
      %v1099 = vmax.f32 %v1091, 0.0
      %v1100 = vmax.f32 %v1092, 0.0
      %v1101 = vmax.f32 %v1093, 0.0
      %v1102 = vmax.f32 %v1094, 0.0
      %v1103 = vmax.f32 %v1095, 0.0
      %v1104 = vmax.f32 %v1096, 0.0
      %1105 = vrot.lane.b32.xlu0 %v1097, 17
      %v1106 = vpop.permute.xlu0 %1105
      %1107 = vrot.lane.b32.xlu0 %v1099, 17
      %v1108 = vpop.permute.xlu0 %1107
      %1109 = vrot.lane.b32.xlu0 %v1101, 17
      %v1110 = vpop.permute.xlu0 %1109
      %1111 = vrot.lane.b32.xlu0 %v1103, 17
      %v1112 = vpop.permute.xlu0 %1111
      %1113 = vrot.lane.b32.xlu0 %v1098, 17
      %v1114 = vpop.permute.xlu0 %1113
      %1115 = vrot.lane.b32.xlu0 %v1100, 17
      %v1116 = vpop.permute.xlu0 %1115
      %1117 = vrot.lane.b32.xlu0 %v1102, 17
      %v1118 = vpop.permute.xlu0 %1117
      %1119 = vrot.lane.b32.xlu0 %v1104, 17
      %v1120 = vpop.permute.xlu0 %1119
      %v1121 = vsel %vm655, %v1106, %v1114
      %v1122 = vsel %vm655, %v1108, %v1116
      %v1123 = vsel %vm655, %v1110, %v1118
      %v1124 = vsel %vm655, %v1112, %v1120
      %v1125 = vsel %vm655, %v1114, %v1106
      %v1126 = vsel %vm655, %v1116, %v1108
      %v1127 = vsel %vm655, %v1118, %v1110
      %v1128 = vsel %vm655, %v1120, %v1112
      %v1129 = vmul.f32 %v1125, %v660
      %v1130 = vmul.f32 %v1121, %v661
      %v1131 = vmul.f32 %v1126, %v660
      %v1132 = vmul.f32 %v1122, %v661
      %v1133 = vmul.f32 %v1127, %v660
      %v1134 = vmul.f32 %v1123, %v661
      %v1135 = vmul.f32 %v1128, %v660
      %v1136 = vmul.f32 %v1124, %v661
      %v1137 = vpack.c.bf16 %v1130, %v1129
      %v1138 = vpack.c.bf16 %v1132, %v1131
      %v1139 = vpack.c.bf16 %v1134, %v1133
      %v1140 = vpack.c.bf16 %v1136, %v1135
      %1141 = vst [vmem:[#allocation2] sm:$0xff] %v1137
      %1142 = vst [vmem:[#allocation2 + $0x8] sm:$0xff] %v1138
      %1143 = vst [vmem:[#allocation2 + $0x10] sm:$0xff] %v1139
      %1144 = vst [vmem:[#allocation2 + $0x18] sm:$0xff] %v1140
      %1145 = vrot.lane.b32.xlu0 %v1097, 16
      %v1146 = vpop.permute.xlu0 %1145
      %1147 = vrot.lane.b32.xlu0 %v1099, 16
      %v1148 = vpop.permute.xlu0 %1147
      %1149 = vrot.lane.b32.xlu0 %v1101, 16
      %v1150 = vpop.permute.xlu0 %1149
      %1151 = vrot.lane.b32.xlu0 %v1103, 16
      %v1152 = vpop.permute.xlu0 %1151
      %1153 = vrot.lane.b32.xlu0 %v1098, 16
      %v1154 = vpop.permute.xlu0 %1153
      %1155 = vrot.lane.b32.xlu0 %v1100, 16
      %v1156 = vpop.permute.xlu0 %1155
      %1157 = vrot.lane.b32.xlu0 %v1102, 16
      %v1158 = vpop.permute.xlu0 %1157
      %1159 = vrot.lane.b32.xlu0 %v1104, 16
      %v1160 = vpop.permute.xlu0 %1159
      %v1161 = vsel %vm670, %v1146, %v1154
      %v1162 = vsel %vm670, %v1148, %v1156
      %v1163 = vsel %vm670, %v1150, %v1158
      %v1164 = vsel %vm670, %v1152, %v1160
      %v1165 = vsel %vm670, %v1154, %v1146
      %v1166 = vsel %vm670, %v1156, %v1148
      %v1167 = vsel %vm670, %v1158, %v1150
      %v1168 = vsel %vm670, %v1160, %v1152
      %v1169 = vld [vmem:[%s673] ss:$8 sm:$0x3]
      %v1171 = vperm.slane %v1169, 0
      %v1172 = vperm.slane %v1169, 1
      %v1175 = vmul.f32 %v1165, %v1171
      %v1176 = vmul.f32 %v1161, %v1172
      %v1177 = vmul.f32 %v1166, %v1171
      %v1178 = vmul.f32 %v1162, %v1172
      %v1179 = vmul.f32 %v1167, %v1171
      %v1180 = vmul.f32 %v1163, %v1172
      %v1181 = vmul.f32 %v1168, %v1171
      %v1182 = vmul.f32 %v1164, %v1172
      %v1183 = vpack.c.bf16 %v1176, %v1175
      %v1184 = vpack.c.bf16 %v1178, %v1177
      %v1185 = vpack.c.bf16 %v1180, %v1179
      %v1186 = vpack.c.bf16 %v1182, %v1181
      %1187 = vst [vmem:[#allocation2 + $0x20] sm:$0xff] %v1183
      %1188 = vst [vmem:[#allocation2 + $0x28] sm:$0xff] %v1184
      %1189 = vst [vmem:[#allocation2 + $0x30] sm:$0xff] %v1185
      %1190 = vst [vmem:[#allocation2 + $0x38] sm:$0xff] %v1186
      %1191 = vrot.lane.b32.xlu0 %v1097, 15
      %v1192 = vpop.permute.xlu0 %1191
      %1193 = vrot.lane.b32.xlu0 %v1099, 15
      %v1194 = vpop.permute.xlu0 %1193
      %1195 = vrot.lane.b32.xlu0 %v1101, 15
      %v1196 = vpop.permute.xlu0 %1195
      %1197 = vrot.lane.b32.xlu0 %v1103, 15
      %v1198 = vpop.permute.xlu0 %1197
      %1199 = vrot.lane.b32.xlu0 %v1098, 15
      %v1200 = vpop.permute.xlu0 %1199
      %1201 = vrot.lane.b32.xlu0 %v1100, 15
      %v1202 = vpop.permute.xlu0 %1201
      %1203 = vrot.lane.b32.xlu0 %v1102, 15
      %v1204 = vpop.permute.xlu0 %1203
      %1205 = vrot.lane.b32.xlu0 %v1104, 15
      %v1206 = vpop.permute.xlu0 %1205
      %v1207 = vsel %vm686, %v1192, %v1200
      %v1208 = vsel %vm686, %v1194, %v1202
      %v1209 = vsel %vm686, %v1196, %v1204
      %v1210 = vsel %vm686, %v1198, %v1206
      %v1211 = vsel %vm686, %v1200, %v1192
      %v1212 = vsel %vm686, %v1202, %v1194
      %v1213 = vsel %vm686, %v1204, %v1196
      %v1214 = vsel %vm686, %v1206, %v1198
      %v1215 = vld [vmem:[%s689] ss:$8 sm:$0x3]
      %v1217 = vperm.slane %v1215, 0
      %v1218 = vperm.slane %v1215, 1
      %v1221 = vmul.f32 %v1211, %v1217
      %v1222 = vmul.f32 %v1207, %v1218
      %v1223 = vmul.f32 %v1212, %v1217
      %v1224 = vmul.f32 %v1208, %v1218
      %v1225 = vmul.f32 %v1213, %v1217
      %v1226 = vmul.f32 %v1209, %v1218
      %v1227 = vmul.f32 %v1214, %v1217
      %v1228 = vmul.f32 %v1210, %v1218
      %v1229 = vpack.c.bf16 %v1222, %v1221
      %v1230 = vpack.c.bf16 %v1224, %v1223
      %v1231 = vpack.c.bf16 %v1226, %v1225
      %v1232 = vpack.c.bf16 %v1228, %v1227
      %1233 = vst [vmem:[#allocation2 + $0x40] sm:$0xff] %v1229
      %1234 = vst [vmem:[#allocation2 + $0x48] sm:$0xff] %v1230
      %1235 = vst [vmem:[#allocation2 + $0x50] sm:$0xff] %v1231
      %1236 = vst [vmem:[#allocation2 + $0x58] sm:$0xff] %v1232
      %1237 = vrot.lane.b32.xlu0 %v1097, 1
      %v1238 = vpop.permute.xlu0 %1237
      %1239 = vrot.lane.b32.xlu0 %v1099, 1
      %v1240 = vpop.permute.xlu0 %1239
      %1241 = vrot.lane.b32.xlu0 %v1101, 1
      %v1242 = vpop.permute.xlu0 %1241
      %1243 = vrot.lane.b32.xlu0 %v1103, 1
      %v1244 = vpop.permute.xlu0 %1243
      %1245 = vrot.lane.b32.xlu0 %v1098, 1
      %v1246 = vpop.permute.xlu0 %1245
      %1247 = vrot.lane.b32.xlu0 %v1100, 1
      %v1248 = vpop.permute.xlu0 %1247
      %1249 = vrot.lane.b32.xlu0 %v1102, 1
      %v1250 = vpop.permute.xlu0 %1249
      %1251 = vrot.lane.b32.xlu0 %v1104, 1
      %v1252 = vpop.permute.xlu0 %1251
      %v1253 = vsel %vm702, %v1238, %v1246
      %v1254 = vsel %vm702, %v1240, %v1248
      %v1255 = vsel %vm702, %v1242, %v1250
      %v1256 = vsel %vm702, %v1244, %v1252
      %v1257 = vsel %vm702, %v1246, %v1238
      %v1258 = vsel %vm702, %v1248, %v1240
      %v1259 = vsel %vm702, %v1250, %v1242
      %v1260 = vsel %vm702, %v1252, %v1244
      %v1261 = vld [vmem:[%s705] ss:$8 sm:$0x3]
      %v1263 = vperm.slane %v1261, 0
      %v1264 = vperm.slane %v1261, 1
      %v1267 = vmul.f32 %v1257, %v1263
      %v1268 = vmul.f32 %v1253, %v1264
      %v1269 = vmul.f32 %v1258, %v1263
      %v1270 = vmul.f32 %v1254, %v1264
      %v1271 = vmul.f32 %v1259, %v1263
      %v1272 = vmul.f32 %v1255, %v1264
      %v1273 = vmul.f32 %v1260, %v1263
      %v1274 = vmul.f32 %v1256, %v1264
      %v1275 = vpack.c.bf16 %v1268, %v1267
      %v1276 = vpack.c.bf16 %v1270, %v1269
      %v1277 = vpack.c.bf16 %v1272, %v1271
      %v1278 = vpack.c.bf16 %v1274, %v1273
      %1279 = vst [vmem:[#allocation2 + $0x60] sm:$0xff] %v1275
      %1280 = vst [vmem:[#allocation2 + $0x68] sm:$0xff] %v1276
      %1281 = vst [vmem:[#allocation2 + $0x70] sm:$0xff] %v1277
      %1282 = vst [vmem:[#allocation2 + $0x78] sm:$0xff] %v1278
      %v1283 = vpack.c.bf16 %v1098, %v1097
      %v1284 = vpack.c.bf16 %v1100, %v1099
      %v1285 = vpack.c.bf16 %v1102, %v1101
      %v1286 = vpack.c.bf16 %v1104, %v1103
      %1287 = vst [vmem:[#allocation2 + $0x80] sm:$0xff] %v1283
      %1288 = vst [vmem:[#allocation2 + $0x88] sm:$0xff] %v1284
      %1289 = vst [vmem:[#allocation2 + $0x90] sm:$0xff] %v1285
      %1290 = vst [vmem:[#allocation2 + $0x98] sm:$0xff] %v1286
      %1291 = vrot.lane.b32.xlu0 %v1097, 127
      %v1292 = vpop.permute.xlu0 %1291
      %1293 = vrot.lane.b32.xlu0 %v1099, 127
      %v1294 = vpop.permute.xlu0 %1293
      %1295 = vrot.lane.b32.xlu0 %v1101, 127
      %v1296 = vpop.permute.xlu0 %1295
      %1297 = vrot.lane.b32.xlu0 %v1103, 127
      %v1298 = vpop.permute.xlu0 %1297
      %1299 = vrot.lane.b32.xlu0 %v1098, 127
      %v1300 = vpop.permute.xlu0 %1299
      %1301 = vrot.lane.b32.xlu0 %v1100, 127
      %v1302 = vpop.permute.xlu0 %1301
      %1303 = vrot.lane.b32.xlu0 %v1102, 127
      %v1304 = vpop.permute.xlu0 %1303
      %1305 = vrot.lane.b32.xlu0 %v1104, 127
      %v1306 = vpop.permute.xlu0 %1305
      %v1307 = vsel %vm718, %v1292, %v1300
      %v1308 = vsel %vm718, %v1294, %v1302
      %v1309 = vsel %vm718, %v1296, %v1304
      %v1310 = vsel %vm718, %v1298, %v1306
      %v1311 = vsel %vm718, %v1300, %v1292
      %v1312 = vsel %vm718, %v1302, %v1294
      %v1313 = vsel %vm718, %v1304, %v1296
      %v1314 = vsel %vm718, %v1306, %v1298
      %v1315 = vld [vmem:[%s721] ss:$8 sm:$0x3]
      %v1317 = vperm.slane %v1315, 0
      %v1318 = vperm.slane %v1315, 1
      %v1321 = vmul.f32 %v1307, %v1317
      %v1322 = vmul.f32 %v1311, %v1318
      %v1323 = vmul.f32 %v1308, %v1317
      %v1324 = vmul.f32 %v1312, %v1318
      %v1325 = vmul.f32 %v1309, %v1317
      %v1326 = vmul.f32 %v1313, %v1318
      %v1327 = vmul.f32 %v1310, %v1317
      %v1328 = vmul.f32 %v1314, %v1318
      %v1329 = vpack.c.bf16 %v1322, %v1321
      %v1330 = vpack.c.bf16 %v1324, %v1323
      %v1331 = vpack.c.bf16 %v1326, %v1325
      %v1332 = vpack.c.bf16 %v1328, %v1327
      %1333 = vst [vmem:[#allocation2 + $0xa0] sm:$0xff] %v1329
      %1334 = vst [vmem:[#allocation2 + $0xa8] sm:$0xff] %v1330
      %1335 = vst [vmem:[#allocation2 + $0xb0] sm:$0xff] %v1331
      %1336 = vst [vmem:[#allocation2 + $0xb8] sm:$0xff] %v1332
      %1337 = vrot.lane.b32.xlu0 %v1097, 113
      %v1338 = vpop.permute.xlu0 %1337
      %1339 = vrot.lane.b32.xlu0 %v1099, 113
      %v1340 = vpop.permute.xlu0 %1339
      %1341 = vrot.lane.b32.xlu0 %v1101, 113
      %v1342 = vpop.permute.xlu0 %1341
      %1343 = vrot.lane.b32.xlu0 %v1103, 113
      %v1344 = vpop.permute.xlu0 %1343
      %1345 = vrot.lane.b32.xlu0 %v1098, 113
      %v1346 = vpop.permute.xlu0 %1345
      %1347 = vrot.lane.b32.xlu0 %v1100, 113
      %v1348 = vpop.permute.xlu0 %1347
      %1349 = vrot.lane.b32.xlu0 %v1102, 113
      %v1350 = vpop.permute.xlu0 %1349
      %1351 = vrot.lane.b32.xlu0 %v1104, 113
      %v1352 = vpop.permute.xlu0 %1351
      %v1353 = vsel %vm734, %v1338, %v1346
      %v1354 = vsel %vm734, %v1340, %v1348
      %v1355 = vsel %vm734, %v1342, %v1350
      %v1356 = vsel %vm734, %v1344, %v1352
      %v1357 = vsel %vm734, %v1346, %v1338
      %v1358 = vsel %vm734, %v1348, %v1340
      %v1359 = vsel %vm734, %v1350, %v1342
      %v1360 = vsel %vm734, %v1352, %v1344
      %v1361 = vld [vmem:[%s737] ss:$8 sm:$0x3]
      %v1363 = vperm.slane %v1361, 0
      %v1364 = vperm.slane %v1361, 1
      %v1367 = vmul.f32 %v1353, %v1363
      %v1368 = vmul.f32 %v1357, %v1364
      %v1369 = vmul.f32 %v1354, %v1363
      %v1370 = vmul.f32 %v1358, %v1364
      %v1371 = vmul.f32 %v1355, %v1363
      %v1372 = vmul.f32 %v1359, %v1364
      %v1373 = vmul.f32 %v1356, %v1363
      %v1374 = vmul.f32 %v1360, %v1364
      %v1375 = vpack.c.bf16 %v1368, %v1367
      %v1376 = vpack.c.bf16 %v1370, %v1369
      %v1377 = vpack.c.bf16 %v1372, %v1371
      %v1378 = vpack.c.bf16 %v1374, %v1373
      %1379 = vst [vmem:[#allocation2 + $0xc0] sm:$0xff] %v1375
      %1380 = vst [vmem:[#allocation2 + $0xc8] sm:$0xff] %v1376
      %1381 = vst [vmem:[#allocation2 + $0xd0] sm:$0xff] %v1377
      %1382 = vst [vmem:[#allocation2 + $0xd8] sm:$0xff] %v1378
      %1383 = vrot.lane.b32.xlu0 %v1097, 112
      %v1384 = vpop.permute.xlu0 %1383
      %1385 = vrot.lane.b32.xlu0 %v1099, 112
      %v1386 = vpop.permute.xlu0 %1385
      %1387 = vrot.lane.b32.xlu0 %v1101, 112
      %v1388 = vpop.permute.xlu0 %1387
      %1389 = vrot.lane.b32.xlu0 %v1103, 112
      %v1390 = vpop.permute.xlu0 %1389
      %1391 = vrot.lane.b32.xlu0 %v1098, 112
      %v1392 = vpop.permute.xlu0 %1391
      %1393 = vrot.lane.b32.xlu0 %v1100, 112
      %v1394 = vpop.permute.xlu0 %1393
      %1395 = vrot.lane.b32.xlu0 %v1102, 112
      %v1396 = vpop.permute.xlu0 %1395
      %1397 = vrot.lane.b32.xlu0 %v1104, 112
      %v1398 = vpop.permute.xlu0 %1397
      %v1399 = vsel %vm750, %v1384, %v1392
      %v1400 = vsel %vm750, %v1386, %v1394
      %v1401 = vsel %vm750, %v1388, %v1396
      %v1402 = vsel %vm750, %v1390, %v1398
      %v1403 = vsel %vm750, %v1392, %v1384
      %v1404 = vsel %vm750, %v1394, %v1386
      %v1405 = vsel %vm750, %v1396, %v1388
      %v1406 = vsel %vm750, %v1398, %v1390
      %v1407 = vld [vmem:[%s753] ss:$8 sm:$0x3]
      %v1409 = vperm.slane %v1407, 0
      %v1410 = vperm.slane %v1407, 1
      %v1413 = vmul.f32 %v1399, %v1409
      %v1414 = vmul.f32 %v1403, %v1410
      %v1415 = vmul.f32 %v1400, %v1409
      %v1416 = vmul.f32 %v1404, %v1410
      %v1417 = vmul.f32 %v1401, %v1409
      %v1418 = vmul.f32 %v1405, %v1410
      %v1419 = vmul.f32 %v1402, %v1409
      %v1420 = vmul.f32 %v1406, %v1410
      %v1421 = vpack.c.bf16 %v1414, %v1413
      %v1422 = vpack.c.bf16 %v1416, %v1415
      %v1423 = vpack.c.bf16 %v1418, %v1417
      %v1424 = vpack.c.bf16 %v1420, %v1419
      %1425 = vst [vmem:[#allocation2 + $0xe0] sm:$0xff] %v1421
      %1426 = vst [vmem:[#allocation2 + $0xe8] sm:$0xff] %v1422
      %1427 = vst [vmem:[#allocation2 + $0xf0] sm:$0xff] %v1423
      %1428 = vst [vmem:[#allocation2 + $0xf8] sm:$0xff] %v1424
      %1429 = vrot.lane.b32.xlu0 %v1097, 111
      %v1430 = vpop.permute.xlu0 %1429
      %1431 = vrot.lane.b32.xlu0 %v1099, 111
      %v1432 = vpop.permute.xlu0 %1431
      %1433 = vrot.lane.b32.xlu0 %v1101, 111
      %v1434 = vpop.permute.xlu0 %1433
      %1435 = vrot.lane.b32.xlu0 %v1103, 111
      %v1436 = vpop.permute.xlu0 %1435
      %1437 = vrot.lane.b32.xlu0 %v1098, 111
      %v1438 = vpop.permute.xlu0 %1437
      %1439 = vrot.lane.b32.xlu0 %v1100, 111
      %v1440 = vpop.permute.xlu0 %1439
      %1441 = vrot.lane.b32.xlu0 %v1102, 111
      %v1442 = vpop.permute.xlu0 %1441
      %1443 = vrot.lane.b32.xlu0 %v1104, 111
      %v1444 = vpop.permute.xlu0 %1443
      %v1445 = vsel %vm766, %v1430, %v1438
      %v1446 = vsel %vm766, %v1432, %v1440
      %v1447 = vsel %vm766, %v1434, %v1442
      %v1448 = vsel %vm766, %v1436, %v1444
      %v1449 = vsel %vm766, %v1438, %v1430
      %v1450 = vsel %vm766, %v1440, %v1432
      %v1451 = vsel %vm766, %v1442, %v1434
      %v1452 = vsel %vm766, %v1444, %v1436
      %v1453 = vld [vmem:[%s769] ss:$8 sm:$0x3]
      %v1455 = vperm.slane %v1453, 0
      %v1456 = vperm.slane %v1453, 1
      %v1459 = vmul.f32 %v1445, %v1455
      %v1460 = vmul.f32 %v1449, %v1456
      %v1461 = vmul.f32 %v1446, %v1455
      %v1462 = vmul.f32 %v1450, %v1456
      %v1463 = vmul.f32 %v1447, %v1455
      %v1464 = vmul.f32 %v1451, %v1456
      %v1465 = vmul.f32 %v1448, %v1455
      %v1466 = vmul.f32 %v1452, %v1456
      %v1467 = vpack.c.bf16 %v1460, %v1459
      %v1468 = vpack.c.bf16 %v1462, %v1461
      %v1469 = vpack.c.bf16 %v1464, %v1463
      %v1470 = vpack.c.bf16 %v1466, %v1465
      %1471 = vst [vmem:[#allocation2 + $0x100] sm:$0xff] %v1467
      %1472 = vst [vmem:[#allocation2 + $0x108] sm:$0xff] %v1468
      %1473 = vst [vmem:[#allocation2 + $0x110] sm:$0xff] %v1469
      %1474 = vst [vmem:[#allocation2 + $0x118] sm:$0xff] %v1470
      %v1475 = vld [vmem:[%s13] sm:$0x3f]
      %v1476 = vld [vmem:[#allocation2] sm:$0xff]
      %v1477 = vld [vmem:[#allocation2 + $0x8] sm:$0xff]
      %v1478 = vld [vmem:[#allocation2 + $0x10] sm:$0xff]
      %v1479 = vld [vmem:[#allocation2 + $0x18] sm:$0xff]
      %v1480 = vld [vmem:[#allocation2 + $0x20] sm:$0xff]
      %v1481 = vld [vmem:[#allocation2 + $0x28] sm:$0xff]
      %v1482 = vld [vmem:[#allocation2 + $0x30] sm:$0xff]
      %v1483 = vld [vmem:[#allocation2 + $0x38] sm:$0xff]
      %v1484 = vld [vmem:[#allocation2 + $0x40] sm:$0xff]
      %v1485 = vld [vmem:[#allocation2 + $0x48] sm:$0xff]
      %v1486 = vld [vmem:[#allocation2 + $0x50] sm:$0xff]
      %v1487 = vld [vmem:[#allocation2 + $0x58] sm:$0xff]
      %v1488 = vld [vmem:[#allocation2 + $0x60] sm:$0xff]
      %v1489 = vld [vmem:[#allocation2 + $0x68] sm:$0xff]
      %v1490 = vld [vmem:[#allocation2 + $0x70] sm:$0xff]
      %v1491 = vld [vmem:[#allocation2 + $0x78] sm:$0xff]
      %v1492 = vld [vmem:[#allocation2 + $0x80] sm:$0xff]
      %v1493 = vld [vmem:[#allocation2 + $0x88] sm:$0xff]
      %v1494 = vld [vmem:[#allocation2 + $0x90] sm:$0xff]
      %v1495 = vld [vmem:[#allocation2 + $0x98] sm:$0xff]
      %v1496 = vld [vmem:[#allocation2 + $0xa0] sm:$0xff]
      %v1497 = vld [vmem:[#allocation2 + $0xa8] sm:$0xff]
      %v1498 = vld [vmem:[#allocation2 + $0xb0] sm:$0xff]
      %v1499 = vld [vmem:[#allocation2 + $0xb8] sm:$0xff]
      %v1500 = vld [vmem:[#allocation2 + $0xc0] sm:$0xff]
      %v1501 = vld [vmem:[#allocation2 + $0xc8] sm:$0xff]
      %v1502 = vld [vmem:[#allocation2 + $0xd0] sm:$0xff]
      %v1503 = vld [vmem:[#allocation2 + $0xd8] sm:$0xff]
      %v1504 = vld [vmem:[#allocation2 + $0xe0] sm:$0xff]
      %v1505 = vld [vmem:[#allocation2 + $0xe8] sm:$0xff]
      %v1506 = vld [vmem:[#allocation2 + $0xf0] sm:$0xff]
      %v1507 = vld [vmem:[#allocation2 + $0xf8] sm:$0xff]
      %v1508 = vld [vmem:[#allocation2 + $0x100] sm:$0xff]
      %v1509 = vld [vmem:[#allocation2 + $0x108] sm:$0xff]
      %v1510 = vld [vmem:[#allocation2 + $0x110] sm:$0xff]
      %v1511 = vld [vmem:[#allocation2 + $0x118] sm:$0xff]
      %v1512 = vld [vmem:[%s14] sm:$0xf]
      %1514 = vset.pattern.permute.xlu0 0
      %1515 = vperm.xlu0 %1514, %v1512
      %v1516 = vpop.permute.xlu0 %1515
      %1519 = vst [vmem:[#allocation1] ss:$4 sm:$0xff] %v1475
      %v1520 = vld.sshfl [vmem:[#allocation1] sm:$0xff pattern:$0x73625140]
      %v1521 = vld.sshfl [vmem:[#allocation1 + $0x8] sm:$0xff pattern:$0x73625140]
      %v1522 = vld.sshfl [vmem:[#allocation1 + $0x10] sm:$0xff pattern:$0x73625140]
      %v1561 = vunpack.c.l.b16 %v1476
      %v1562 = vunpack.c.h.b16 %v1476
      %v1563 = vunpack.c.l.b16 %v1477
      %v1564 = vunpack.c.h.b16 %v1477
      %v1565 = vunpack.c.l.b16 %v1478
      %v1566 = vunpack.c.h.b16 %v1478
      %v1567 = vunpack.c.l.b16 %v1479
      %v1568 = vunpack.c.h.b16 %v1479
      %v1569 = vunpack.c.l.b16 %v1480
      %v1570 = vunpack.c.h.b16 %v1480
      %v1571 = vunpack.c.l.b16 %v1481
      %v1572 = vunpack.c.h.b16 %v1481
      %v1573 = vunpack.c.l.b16 %v1482
      %v1574 = vunpack.c.h.b16 %v1482
      %v1575 = vunpack.c.l.b16 %v1483
      %v1576 = vunpack.c.h.b16 %v1483
      %v1577 = vunpack.c.l.b16 %v1484
      %v1578 = vunpack.c.h.b16 %v1484
      %v1579 = vunpack.c.l.b16 %v1485
      %v1580 = vunpack.c.h.b16 %v1485
      %v1581 = vunpack.c.l.b16 %v1486
      %v1582 = vunpack.c.h.b16 %v1486
      %v1583 = vunpack.c.l.b16 %v1487
      %v1584 = vunpack.c.h.b16 %v1487
      %v1585 = vunpack.c.l.b16 %v1488
      %v1586 = vunpack.c.h.b16 %v1488
      %v1587 = vunpack.c.l.b16 %v1489
      %v1588 = vunpack.c.h.b16 %v1489
      %v1589 = vunpack.c.l.b16 %v1490
      %v1590 = vunpack.c.h.b16 %v1490
      %v1591 = vunpack.c.l.b16 %v1491
      %v1592 = vunpack.c.h.b16 %v1491
      %v1593 = vunpack.c.l.b16 %v1492
      %v1594 = vunpack.c.h.b16 %v1492
      %v1595 = vunpack.c.l.b16 %v1493
      %v1596 = vunpack.c.h.b16 %v1493
      %v1597 = vunpack.c.l.b16 %v1494
      %v1598 = vunpack.c.h.b16 %v1494
      %v1599 = vunpack.c.l.b16 %v1495
      %v1600 = vunpack.c.h.b16 %v1495
      %v1601 = vunpack.c.l.b16 %v1496
      %v1602 = vunpack.c.h.b16 %v1496
      %v1603 = vunpack.c.l.b16 %v1497
      %v1604 = vunpack.c.h.b16 %v1497
      %v1605 = vunpack.c.l.b16 %v1498
      %v1606 = vunpack.c.h.b16 %v1498
      %v1607 = vunpack.c.l.b16 %v1499
      %v1608 = vunpack.c.h.b16 %v1499
      %v1609 = vunpack.c.l.b16 %v1500
      %v1610 = vunpack.c.h.b16 %v1500
      %v1611 = vunpack.c.l.b16 %v1501
      %v1612 = vunpack.c.h.b16 %v1501
      %v1613 = vunpack.c.l.b16 %v1502
      %v1614 = vunpack.c.h.b16 %v1502
      %v1615 = vunpack.c.l.b16 %v1503
      %v1616 = vunpack.c.h.b16 %v1503
      %v1617 = vunpack.c.l.b16 %v1504
      %v1618 = vunpack.c.h.b16 %v1504
      %v1619 = vunpack.c.l.b16 %v1505
      %v1620 = vunpack.c.h.b16 %v1505
      %v1621 = vunpack.c.l.b16 %v1506
      %v1622 = vunpack.c.h.b16 %v1506
      %v1623 = vunpack.c.l.b16 %v1507
      %v1624 = vunpack.c.h.b16 %v1507
      %v1625 = vunpack.c.l.b16 %v1508
      %v1626 = vunpack.c.h.b16 %v1508
      %v1627 = vunpack.c.l.b16 %v1509
      %v1628 = vunpack.c.h.b16 %v1509
      %v1629 = vunpack.c.l.b16 %v1510
      %v1630 = vunpack.c.h.b16 %v1510
      %v1631 = vunpack.c.l.b16 %v1511
      %v1632 = vunpack.c.h.b16 %v1511
      %v1633 = vpack.c.b16 %v1563, %v1561
      %v1634 = vpack.c.b16 %v1564, %v1562
      %v1635 = vpack.c.b16 %v1567, %v1565
      %v1636 = vpack.c.b16 %v1568, %v1566
      %v1637 = vpack.c.b16 %v1571, %v1569
      %v1638 = vpack.c.b16 %v1572, %v1570
      %v1639 = vpack.c.b16 %v1575, %v1573
      %v1640 = vpack.c.b16 %v1576, %v1574
      %v1641 = vpack.c.b16 %v1579, %v1577
      %v1642 = vpack.c.b16 %v1580, %v1578
      %v1643 = vpack.c.b16 %v1583, %v1581
      %v1644 = vpack.c.b16 %v1584, %v1582
      %v1645 = vpack.c.b16 %v1587, %v1585
      %v1646 = vpack.c.b16 %v1588, %v1586
      %v1647 = vpack.c.b16 %v1591, %v1589
      %v1648 = vpack.c.b16 %v1592, %v1590
      %v1649 = vpack.c.b16 %v1595, %v1593
      %v1650 = vpack.c.b16 %v1596, %v1594
      %v1651 = vpack.c.b16 %v1599, %v1597
      %v1652 = vpack.c.b16 %v1600, %v1598
      %v1653 = vpack.c.b16 %v1603, %v1601
      %v1654 = vpack.c.b16 %v1604, %v1602
      %v1655 = vpack.c.b16 %v1607, %v1605
      %v1656 = vpack.c.b16 %v1608, %v1606
      %v1657 = vpack.c.b16 %v1611, %v1609
      %v1658 = vpack.c.b16 %v1612, %v1610
      %v1659 = vpack.c.b16 %v1615, %v1613
      %v1660 = vpack.c.b16 %v1616, %v1614
      %v1661 = vpack.c.b16 %v1619, %v1617
      %v1662 = vpack.c.b16 %v1620, %v1618
      %v1663 = vpack.c.b16 %v1623, %v1621
      %v1664 = vpack.c.b16 %v1624, %v1622
      %v1665 = vpack.c.b16 %v1627, %v1625
      %v1666 = vpack.c.b16 %v1628, %v1626
      %v1667 = vpack.c.b16 %v1631, %v1629
      %v1668 = vpack.c.b16 %v1632, %v1630
      %v1705 = vsel %vm988, %v1522, 0
      %1707 = vmatpush.bf16.msra.mxu0 %v1647
      %1708 = vmatpush.bf16.msra.mxu0 %v1645
      %1709 = vmatpush.bf16.msra.mxu0 %v1643
      %1710 = vmatpush.bf16.msra.mxu0 %v1641
      %1711 = vmatpush.bf16.msra.mxu0 %v1639
      %1712 = vmatpush.bf16.msra.mxu0 %v1637
      %1713 = vmatpush.bf16.msra.mxu0 %v1635
      %1714 = vmatpush.bf16.msra.mxu0 %v1633
      %1715 = vmatmul.bf16.gmra.mxu0 %v1520
      %v1716 = vpop.f32.mrf.mxu0
      %v1717 = vadd.f32 %v1516, %v1716
      %v1718 = vpop.f32.mrf.mxu0
      %1719 = vdwg.mxu0
      %1720 = vmatpush.bf16.msra.mxu0 %v1663
      %1721 = vmatpush.bf16.msra.mxu0 %v1661
      %1722 = vmatpush.bf16.msra.mxu0 %v1659
      %1723 = vmatpush.bf16.msra.mxu0 %v1657
      %1724 = vmatpush.bf16.msra.mxu0 %v1655
      %1725 = vmatpush.bf16.msra.mxu0 %v1653
      %1726 = vmatpush.bf16.msra.mxu0 %v1651
      %1727 = vmatpush.bf16.msra.mxu0 %v1649
      %1728 = vmatmul.bf16.gmra.mxu0 %v1521
      %v1729 = vpop.f32.mrf.mxu0
      %v1730 = vadd.f32 %v1717, %v1729
      %v1731 = vpop.f32.mrf.mxu0
      %1732 = vdwg.mxu0
      %1733 = vmatpush.bf16.msra.mxu0 0
      %1734 = vmatpush.bf16.msra.mxu0 0
      %1735 = vmatpush.bf16.msra.mxu0 0
      %1736 = vmatpush.bf16.msra.mxu0 0
      %1737 = vmatpush.bf16.msra.mxu0 0
      %1738 = vmatpush.bf16.msra.mxu0 0
      %1739 = vmatpush.bf16.msra.mxu0 %v1667
      %1740 = vmatpush.bf16.msra.mxu0 %v1665
      %1741 = vmatmul.bf16.gmra.mxu0 %v1705
      %v1742 = vpop.f32.mrf.mxu0
      %v1743 = vadd.f32 %v1730, %v1742
      %v1744 = vpop.f32.mrf.mxu0
      %1745 = vdwg.mxu0
      %1746 = vmatpush.bf16.msra.mxu0 %v1648
      %1747 = vmatpush.bf16.msra.mxu0 %v1646
      %1748 = vmatpush.bf16.msra.mxu0 %v1644
      %1749 = vmatpush.bf16.msra.mxu0 %v1642
      %1750 = vmatpush.bf16.msra.mxu0 %v1640
      %1751 = vmatpush.bf16.msra.mxu0 %v1638
      %1752 = vmatpush.bf16.msra.mxu0 %v1636
      %1753 = vmatpush.bf16.msra.mxu0 %v1634
      %1754 = vmatmul.bf16.gmra.mxu0 %v1520
      %v1755 = vpop.f32.mrf.mxu0
      %v1756 = vadd.f32 %v1516, %v1755
      %v1757 = vpop.f32.mrf.mxu0
      %1758 = vdwg.mxu0
      %1759 = vmatpush.bf16.msra.mxu0 %v1664
      %1760 = vmatpush.bf16.msra.mxu0 %v1662
      %1761 = vmatpush.bf16.msra.mxu0 %v1660
      %1762 = vmatpush.bf16.msra.mxu0 %v1658
      %1763 = vmatpush.bf16.msra.mxu0 %v1656
      %1764 = vmatpush.bf16.msra.mxu0 %v1654
      %1765 = vmatpush.bf16.msra.mxu0 %v1652
      %1766 = vmatpush.bf16.msra.mxu0 %v1650
      %1767 = vmatmul.bf16.gmra.mxu0 %v1521
      %v1768 = vpop.f32.mrf.mxu0
      %v1769 = vadd.f32 %v1756, %v1768
      %v1770 = vpop.f32.mrf.mxu0
      %1771 = vdwg.mxu0
      %1772 = vmatpush.bf16.msra.mxu0 0
      %1773 = vmatpush.bf16.msra.mxu0 0
      %1774 = vmatpush.bf16.msra.mxu0 0
      %1775 = vmatpush.bf16.msra.mxu0 0
      %1776 = vmatpush.bf16.msra.mxu0 0
      %1777 = vmatpush.bf16.msra.mxu0 0
      %1778 = vmatpush.bf16.msra.mxu0 %v1668
      %1779 = vmatpush.bf16.msra.mxu0 %v1666
      %1780 = vmatmul.bf16.gmra.mxu0 %v1705
      %v1781 = vpop.f32.mrf.mxu0
      %v1782 = vadd.f32 %v1769, %v1781
      %v1783 = vpop.f32.mrf.mxu0
      %1784 = vdwg.mxu0
      %v1785 = vld [vmem:[%s15] sm:$0x3]
      %v1786 = vtanh.pop %v1743
      %v1787 = vtanh.pop %v1782
      %1789 = vset.pattern.permute.xlu0 0
      %1790 = vperm.xlu0 %1789, %v1785
      %v1791 = vpop.permute.xlu0 %1790
      %v1793 = vmul.f32 %v1791, %v1786
      %v1794 = vmul.f32 %v1791, %v1787
      %v1797 = vrot.slane %v1743, 2
      %v1798 = vrot.slane %v1782, 2
      %v1801 = vadd.f32 %v601, %v1797
      %v1802 = vadd.f32 %v621, %v1798
      %v1803 = vmul.f32 %v1793, 1.442695
      %v1804 = vpow.pop %v1803
      %v1805 = vmul.f32 %v1794, 1.442695
      %v1806 = vpow.pop %v1805
      %v1807 = vmul.f32 %v1801, %v1804
      %v1808 = vmul.f32 %v1802, %v1806
      %v1809 = vsel %vm814, %v1807, %v601
      %v1810 = vsel %vm814, %v1808, %v621
      %v1813 = vrot.slane %v1810, 4
      %v1814 = vsel %vm578, %v1809, %v1813
      %1816 = vst [vmem:[%s556] sm:$0xff] %v1814
      %v1817 = vsel %vm814, %v1793, 0.0
      %v1818 = vrot.slane %v1817, 4
      %v1819 = vadd.f32 %v1817, %v1818
      %v1820 = vrot.slane %v1819, 2
      %v1821 = vadd.f32 %v1819, %v1820
      %v1822 = vrot.slane %v1821, 1
      %v1823 = vadd.f32 %v1821, %v1822
      %v1824 = vsel %vm814, %v1794, 0.0
      %v1825 = vrot.slane %v1824, 4
      %v1826 = vadd.f32 %v1824, %v1825
      %v1827 = vrot.slane %v1826, 2
      %v1828 = vadd.f32 %v1826, %v1827
      %v1829 = vrot.slane %v1828, 1
      %v1830 = vadd.f32 %v1828, %v1829
      %v1831 = vld [vmem:[%s4] sm:$0xff]
      %v1832 = vld [vmem:[%s4 + $0x8] sm:$0xff]
      %v1833 = vld [vmem:[%s4 + $0x10] sm:$0xff]
      %v1834 = vld [vmem:[%s4 + $0x18] sm:$0xff]
      %v1835 = vld [vmem:[%s4 + $0x20] sm:$0xff]
      %v1836 = vld [vmem:[%s4 + $0x28] sm:$0xff]
      %v1837 = vld [vmem:[%s4 + $0x30] sm:$0xff]
      %v1838 = vld [vmem:[%s4 + $0x38] sm:$0xff]
      %v1839 = vld [vmem:[%s4 + $0x40] sm:$0xff]
      %v1840 = vld [vmem:[%s4 + $0x48] sm:$0xff]
      %v1841 = vld [vmem:[%s4 + $0x50] sm:$0xff]
      %v1842 = vld [vmem:[%s4 + $0x58] sm:$0xff]
      %v1843 = vld [vmem:[%s4 + $0x60] sm:$0xff]
      %v1844 = vld [vmem:[%s4 + $0x68] sm:$0xff]
      %v1845 = vld [vmem:[%s4 + $0x70] sm:$0xff]
      %v1846 = vld [vmem:[%s4 + $0x78] sm:$0xff]
      %v1847 = vld [vmem:[%s4 + $0x80] sm:$0xff]
      %v1848 = vld [vmem:[%s4 + $0x88] sm:$0xff]
      %v1849 = vld [vmem:[%s4 + $0x90] sm:$0xff]
      %v1850 = vld [vmem:[%s4 + $0x98] sm:$0xff]
      %v1851 = vld [vmem:[%s4 + $0xa0] sm:$0xff]
      %v1852 = vld [vmem:[%s4 + $0xa8] sm:$0xff]
      %v1853 = vld [vmem:[%s4 + $0xb0] sm:$0xff]
      %v1854 = vld [vmem:[%s4 + $0xb8] sm:$0xff]
      %v1855 = vld [vmem:[%s4 + $0xc0] sm:$0xff]
      %v1856 = vld [vmem:[%s4 + $0xc8] sm:$0xff]
      %v1857 = vld [vmem:[%s4 + $0xd0] sm:$0xff]
      %v1858 = vld [vmem:[%s4 + $0xd8] sm:$0xff]
      %v1859 = vld [vmem:[%s4 + $0xe0] sm:$0xff]
      %v1860 = vld [vmem:[%s4 + $0xe8] sm:$0xff]
      %v1861 = vld [vmem:[%s4 + $0xf0] sm:$0xff]
      %v1862 = vld [vmem:[%s4 + $0xf8] sm:$0xff]
      %1863 = vmatpush.msra.mxu0 %v1846
      %1864 = vmatpush.msra.mxu0 %v1845
      %1865 = vmatpush.msra.mxu0 %v1844
      %1866 = vmatpush.msra.mxu0 %v1843
      %1867 = vmatpush.msra.mxu0 %v1842
      %1868 = vmatpush.msra.mxu0 %v1841
      %1869 = vmatpush.msra.mxu0 %v1840
      %1870 = vmatpush.msra.mxu0 %v1839
      %1871 = vmatpush.msra.mxu0 %v1838
      %1872 = vmatpush.msra.mxu0 %v1837
      %1873 = vmatpush.msra.mxu0 %v1836
      %1874 = vmatpush.msra.mxu0 %v1835
      %1875 = vmatpush.msra.mxu0 %v1834
      %1876 = vmatpush.msra.mxu0 %v1833
      %1877 = vmatpush.msra.mxu0 %v1832
      %1878 = vmatpush.msra.mxu0 %v1831
      %1879 = vmatmul.f32.gmra.mxu0 %v1823
      %v1880 = vpop.f32.mrf.mxu0
      %v1881 = vadd.f32 0.0, %v1880
      %1882 = vdwg.mxu0
      %1883 = vmatpush.msra.mxu0 %v1862
      %1884 = vmatpush.msra.mxu0 %v1861
      %1885 = vmatpush.msra.mxu0 %v1860
      %1886 = vmatpush.msra.mxu0 %v1859
      %1887 = vmatpush.msra.mxu0 %v1858
      %1888 = vmatpush.msra.mxu0 %v1857
      %1889 = vmatpush.msra.mxu0 %v1856
      %1890 = vmatpush.msra.mxu0 %v1855
      %1891 = vmatpush.msra.mxu0 %v1854
      %1892 = vmatpush.msra.mxu0 %v1853
      %1893 = vmatpush.msra.mxu0 %v1852
      %1894 = vmatpush.msra.mxu0 %v1851
      %1895 = vmatpush.msra.mxu0 %v1850
      %1896 = vmatpush.msra.mxu0 %v1849
      %1897 = vmatpush.msra.mxu0 %v1848
      %1898 = vmatpush.msra.mxu0 %v1847
      %1899 = vmatmul.f32.gmra.mxu0 %v1830
      %v1900 = vpop.f32.mrf.mxu0
      %v1901 = vadd.f32 %v1881, %v1900
      %1902 = vdwg.mxu0
      %vm1903 = vcmask 0
      %1904 = vst.msk [vmem:[%s560] sm:$0x1] %vm1903, %v1901
      %s1905 = smul.u32 2, %s29
      %p1906 = scmp.lt.s32.totalorder %s1905, 3
      %s1907 = scalar_select %p1906, %s1905, 3
      %s1908 = smul.addr %s1907, 4
      %s1909 = scalar_lea.vmem %s16, %s1908
      %p1910 = scmp.lt.s32.totalorder %s29, 1
      %s1911 = scalar_select %p1910, %s29, 1
      %s1912 = scalar_lea.vmem %s17, %s1911
      // Predicated region
      $region85: #{flow_step_forward.1} parent=83 // pred_check
        %p1913 = pneg %p388
      $region86: #{flow_step_forward.1} parent=83 // pred_check_branch
        %1915 = sbr.rel (%p1913) target = $region88
      $region87: #{flow_step_forward.1} parent=83 // pred_region
        %s1916 = smul.u32 2, %s29
      $region88: #{flow_step_forward.1} parent=83 // pred_fallthru
        _
      // Predicated region
      $region89: #{flow_step_forward.1} parent=83 // pred_check
        %p1917 = pneg %p414
      $region90: #{flow_step_forward.1} parent=83 // pred_check_branch
        %1919 = sbr.rel (%p1917) target = $region92
      $region91: #{flow_step_forward.1} parent=83 // pred_region
        _
      $region92: #{flow_step_forward.1} parent=83 // pred_fallthru
        _
    $region84: #{flow_step_forward.1} parent=5 // pred_fallthru
      _
    %p1920 = scmp.le.s32.totalorder 2, %s24
    // Predicated region
    $region93: #{flow_step_forward.1} parent=5 // pred_check
      %p1921 = pneg %p1920
    $region94: #{flow_step_forward.1} parent=5 // pred_check_branch
      %1923 = sbr.rel (%p1921) target = $region96
    $region95: #{flow_step_forward.1} parent=5 // pred_region
      %s1924 = ssub.s32 %s24, 2
      // Predicated region
      $region97: #{flow_step_forward.1} parent=95 // pred_check
        %p1925 = pneg %p394
      $region98: #{flow_step_forward.1} parent=95 // pred_check_branch
        %1927 = sbr.rel (%p1925) target = $region100
      $region99: #{flow_step_forward.1} parent=95 // pred_region
        %s1928 = smul.u32 2, %s30
        %p1929 = scmp.lt.s32.totalorder %s1928, 3
        %s1930 = scalar_select %p1929, %s1928, 3
        %s1931 = smul.addr %s1930, 4
        %s1932 = scalar_lea.vmem %s16, %s1931
      $region100: #{flow_step_forward.1} parent=95 // pred_fallthru
        _
      // Predicated region
      $region101: #{flow_step_forward.1} parent=95 // pred_check
        %p1933 = pneg %p420
      $region102: #{flow_step_forward.1} parent=95 // pred_check_branch
        %1935 = sbr.rel (%p1933) target = $region104
      $region103: #{flow_step_forward.1} parent=95 // pred_region
        %p1936 = scmp.lt.s32.totalorder %s30, 1
        %s1937 = scalar_select %p1936, %s30, 1
        %s1938 = scalar_lea.vmem %s17, %s1937
      $region104: #{flow_step_forward.1} parent=95 // pred_fallthru
        _
    $region96: #{flow_step_forward.1} parent=5 // pred_fallthru
      _
  $region6: #{flow_step_forward.1} parent=0 // loop_footer
    %s28 = sadd.s32 1, %s24
  $region7: #{flow_step_forward.1} parent=0 // loop_footer_branch
    %23 = sbr.rel target = $region3
  $region8: #{flow_step_forward.1} parent=0 // loop_exit
    _

</llo_original>
